<compile_context>
chip_gen: v6e
topology: v6e:2x2x1
jax: 0.10.0
libtpu: 0.0.40
codegen_flags: <defaults>
</compile_context>

<pallas_src>
import functools

import jax
import jax.numpy as jnp
from jax import lax
from jax.experimental import pallas as pl
from jax.experimental.pallas import tpu as pltpu

SELU_ALPHA = 1.6732632423543772848170429916717
SELU_SCALE = 1.0507009873554804934193349852946
LN_EPS = 1e-5


def _selu(x):
    return SELU_SCALE * jnp.where(x > 0, x, SELU_ALPHA * (jnp.exp(x) - 1.0))


# ------------------------------------ kernel ----------------------------------------
def adaptation_kernel(x_ref, w_ref, v_ref, o_ref, *, kernel_size, dilations, dims):
    C, D, H = dims
    B, L, _ = x_ref.shape
    K = kernel_size
    KC = K * C
    BL = B * L
    HD = H + D
    n_convs = 2 * len(dilations)

    # ---- static row offsets into the packed slabs ----------------------------------
    # weight slab (bf16, width max(C,D,H)):   [6 x (K*C,C) conv] [lw] [e1w] [e2w] [e3w]
    R_LW = n_convs * KC
    R_E1 = R_LW + C
    R_E2 = R_E1 + D
    R_E3 = R_E2 + HD
    # vector slab (f32, width H+D): rows 0..5 conv biases, then lb,e1b,e2b,e3b,
    # ln1_g, ln1_b, ln2_g, ln2_b
    ROW_LB = n_convs
    ROW_E1B = n_convs + 1
    ROW_E2B = n_convs + 2
    ROW_E3B = n_convs + 3
    ROW_LN1G = n_convs + 4
    ROW_LN1B = n_convs + 5
    ROW_LN2G = n_convs + 6
    ROW_LN2B = n_convs + 7

    def vec(row, n):
        return v_ref[row:row + 1, 0:n]                                   # (1, n) f32

    # Per-row time index on the flattened (batch*time) sublane axis.  Masks for every
    # distinct causal shift are built once here (trace-time unrolled) and reused by both
    # convs of a block — the roll wraps across batch boundaries but masked rows are
    # exactly those that would have read the left zero-padding.
    t_id = lax.broadcasted_iota(jnp.int32, (BL, C), 0) % L
    shifts = sorted({(K - 1 - k) * d for d in dilations for k in range(K)} - {0})
    masks = {s: (t_id >= s) for s in shifts if s < L}

    def causal_conv(x, conv_idx, d):
        # x: (B*L, C) f32 -> (B*L, C) f32.  One im2col matmul per conv.
        cols = []
        for k in range(K):
            s = (K - 1 - k) * d
            if s == 0:
                cols.append(x)
            elif s >= L:
                cols.append(jnp.zeros_like(x))        # tap only sees left zero-padding
            else:
                shifted = pltpu.roll(x, shift=s, axis=0)
                cols.append(jnp.where(masks[s], shifted, 0.0))
        xs = jnp.concatenate(cols, axis=-1).astype(jnp.bfloat16)         # (B*L, K*C)
        wk = w_ref[conv_idx * KC:(conv_idx + 1) * KC, 0:C]               # (K*C, C) bf16
        y = jnp.dot(xs, wk, preferred_element_type=jnp.float32)          # (B*L, C) f32
        return y + vec(conv_idx, C)                                      # bias epilogue

    def temporal_block(x, bi, d):
        h = jnp.maximum(causal_conv(x, 2 * bi, d), 0.0)       # conv1 -> chomp -> relu
        h = jnp.maximum(causal_conv(h, 2 * bi + 1, d), 0.0)   # conv2 -> chomp -> relu
        # downsample is identity (n_inputs == n_outputs for all AdaptationModule blocks)
        return jnp.maximum(h + x, 0.0)

    x = x_ref[...].astype(jnp.float32).reshape(BL, C)
    for bi, d in enumerate(dilations):
        x = temporal_block(x, bi, d)

    # TCN head: last timestep -> Linear
    feat = x.reshape(B, L, C)[:, L - 1, :]                               # (B, C)
    xu = jnp.dot(feat.astype(jnp.bfloat16), w_ref[R_LW:R_LW + C, 0:D],
                 preferred_element_type=jnp.float32) + vec(ROW_LB, D)    # (B, D)

    # ---- ENVEncoderBuilder (resnet=True) --------------------------------------------
    def layer_norm(cat, g_row, b_row):
        mean = jnp.mean(cat, axis=-1, keepdims=True)
        cm = cat - mean
        var = jnp.mean(cm * cm, axis=-1, keepdims=True)
        return cm * lax.rsqrt(var + LN_EPS) * vec(g_row, HD) + vec(b_row, HD)

    h = _selu(jnp.dot(xu.astype(jnp.bfloat16), w_ref[R_E1:R_E1 + D, 0:H],
                      preferred_element_type=jnp.float32) + vec(ROW_E1B, H))
    cat = layer_norm(jnp.concatenate([h, xu], axis=-1), ROW_LN1G, ROW_LN1B)
    h = _selu(jnp.dot(cat.astype(jnp.bfloat16), w_ref[R_E2:R_E2 + HD, 0:H],
                      preferred_element_type=jnp.float32) + vec(ROW_E2B, H))
    cat = layer_norm(jnp.concatenate([h, xu], axis=-1), ROW_LN2G, ROW_LN2B)
    out = (jnp.dot(cat.astype(jnp.bfloat16), w_ref[R_E3:R_E3 + HD, 0:D],
                   preferred_element_type=jnp.float32) + vec(ROW_E3B, D))
    o_ref[...] = out.astype(o_ref.dtype)


# --------------------------- host-side parameter packing ----------------------------
def pack_params(p, *, in_dim, out_dim, hidden_dim, kernel_size, num_blocks):
    """Done once per weight set; not part of the per-call hot path."""
    C, D, H, K = in_dim, out_dim, hidden_dim, kernel_size
    KC = K * C

    # weight slab (bf16)
    wcols = max(C, D, H)

    def pad_c(a):
        return jnp.pad(a, ((0, 0), (0, wcols - a.shape[1])))

    wparts = []
    for i in range(num_blocks):
        # (K, Cin, Cout) -> (K*Cin, Cout): row k*C + cin == w[k, cin, cout]
        wparts.append(pad_c(p[f"w1_{i}"].reshape(KC, C)))
        wparts.append(pad_c(p[f"w2_{i}"].reshape(KC, C)))
    wparts += [pad_c(p["lw"]), pad_c(p["e1w"]), pad_c(p["e2w"]), pad_c(p["e3w"])]
    w_slab = jnp.concatenate(wparts, axis=0).astype(jnp.bfloat16)

    # vector slab (f32): biases + LayerNorm params, one row each, width H+D
    vcols = H + D

    def vrow(a):
        a = jnp.asarray(a, jnp.float32).reshape(-1)
        return jnp.pad(a, (0, vcols - a.shape[0])).reshape(1, vcols)

    vparts = []
    for i in range(num_blocks):
        vparts.append(vrow(p[f"b1_{i}"]))
        vparts.append(vrow(p[f"b2_{i}"]))
    vparts += [vrow(p["lb"]), vrow(p["e1b"]), vrow(p["e2b"]), vrow(p["e3b"]),
               vrow(p["ln1_g"]), vrow(p["ln1_b"]), vrow(p["ln2_g"]), vrow(p["ln2_b"])]
    v_slab = jnp.concatenate(vparts, axis=0)
    return w_slab, v_slab


def adaptation_forward_packed(x_blc, w_slab, v_slab, *, kernel_size, dilations, dims):
    """x_blc: (B, L, C) float32 (transpose of PyTorch NCL).  Returns (B, out_dim)."""
    B = x_blc.shape[0]
    D = dims[1]
    vmem = pl.BlockSpec(memory_space=pltpu.MemorySpace.VMEM)
    # Single block, no grid: total resident data << 1 MiB on every generation, so the
    # whole problem lives in VMEM with 3 input DMAs.  For large batched inference on
    # v7x, add grid=(B//tb,) over the batch with dimension_semantics=("parallel",).
    return pl.pallas_call(
        functools.partial(adaptation_kernel, kernel_size=kernel_size,
                          dilations=tuple(dilations), dims=dims),
        out_shape=jax.ShapeDtypeStruct((B, D), jnp.float32),
        in_specs=[vmem, vmem, vmem],
        out_specs=vmem,
    )(x_blc, w_slab, v_slab)


def adaptation_forward(x_blc, p, *, kernel_size, dilations):
    B, L, C = x_blc.shape
    D = p["lw"].shape[1]
    H = p["e1w"].shape[1]
    w_slab, v_slab = pack_params(p, in_dim=C, out_dim=D, hidden_dim=H,
                                 kernel_size=kernel_size, num_blocks=len(dilations))
    return adaptation_forward_packed(x_blc, w_slab, v_slab, kernel_size=kernel_size,
                                     dilations=dilations, dims=(C, D, H))


# ----------------------------- pure-JAX reference ------------------------------------
def _layernorm_ref(x, g, b):
    mean = jnp.mean(x, axis=-1, keepdims=True)
    var = jnp.mean((x - mean) ** 2, axis=-1, keepdims=True)
    return (x - mean) * lax.rsqrt(var + LN_EPS) * g + b


def reference_forward(x_blc, p, *, kernel_size, dilations):
    B, L, C = x_blc.shape
    K = kernel_size
    hp = lax.Precision.HIGHEST

    def causal_conv(x, w, b, d):
        pad = (K - 1) * d
        xp = jnp.pad(x, ((0, 0), (pad, 0), (0, 0)))
        out = jnp.zeros((B, L, w.shape[2]), jnp.float32) + b.reshape(1, 1, -1)
        for k in range(K):
            out = out + jnp.einsum("blc,cd->bld", xp[:, k * d:k * d + L, :], w[k],
                                   precision=hp)
        return out

    def block(x, w1, b1, w2, b2, d):
        h = jax.nn.relu(causal_conv(x, w1, b1, d))
        h = jax.nn.relu(causal_conv(h, w2, b2, d))
        return jax.nn.relu(h + x)

    y = x_blc
    for i, d in enumerate(dilations):
        y = block(y, p[f"w1_{i}"], p[f"b1_{i}"], p[f"w2_{i}"], p[f"b2_{i}"], d)
    xu = jnp.dot(y[:, -1, :], p["lw"], precision=hp) + p["lb"][0]

    h = jax.nn.selu(jnp.dot(xu, p["e1w"], precision=hp) + p["e1b"][0])
    cat = jnp.concatenate([h, xu], axis=1)
    cat = _layernorm_ref(cat, p["ln1_g"], p["ln1_b"])
    h = jax.nn.selu(jnp.dot(cat, p["e2w"], precision=hp) + p["e2b"][0])
    cat = jnp.concatenate([h, xu], axis=1)
    cat = _layernorm_ref(cat, p["ln2_g"], p["ln2_b"])
    return jnp.dot(cat, p["e3w"], precision=hp) + p["e3b"][0]


# ----------------------------- parameter init ----------------------------------------
def init_params(key, in_dim, out_dim, hidden_dim, kernel_size, num_blocks=3):
    C, D, H, K = in_dim, out_dim, hidden_dim, kernel_size
    ks = iter(jax.random.split(key, 64))
    p = {}
    for i in range(num_blocks):
        # weight_norm is folded: these are the effective conv weights at inference.
        p[f"w1_{i}"] = 0.05 * jax.random.normal(next(ks), (K, C, C), jnp.float32)
        p[f"b1_{i}"] = 0.05 * jax.random.normal(next(ks), (1, C), jnp.float32)
        p[f"w2_{i}"] = 0.05 * jax.random.normal(next(ks), (K, C, C), jnp.float32)
        p[f"b2_{i}"] = 0.05 * jax.random.normal(next(ks), (1, C), jnp.float32)
    p["lw"] = jax.random.normal(next(ks), (C, D), jnp.float32) / jnp.sqrt(C)
    p["lb"] = jnp.zeros((1, D), jnp.float32)            # weights_init_: Linear bias = 0
    p["e1w"] = jax.random.normal(next(ks), (D, H), jnp.float32) / jnp.sqrt(D)
    p["e1b"] = jnp.zeros((1, H), jnp.float32)
    p["ln1_g"] = 1.0 + 0.1 * jax.random.normal(next(ks), (H + D,), jnp.float32)
    p["ln1_b"] = 0.1 * jax.random.normal(next(ks), (H + D,), jnp.float32)
    p["e2w"] = jax.random.normal(next(ks), (H + D, H), jnp.float32) / jnp.sqrt(H + D)
    p["e2b"] = jnp.zeros((1, H), jnp.float32)
    p["ln2_g"] = 1.0 + 0.1 * jax.random.normal(next(ks), (H + D,), jnp.float32)
    p["ln2_b"] = 0.1 * jax.random.normal(next(ks), (H + D,), jnp.float32)
    p["e3w"] = jax.random.normal(next(ks), (H + D, D), jnp.float32) / jnp.sqrt(H + D)
    p["e3b"] = jnp.zeros((1, D), jnp.float32)
    return p


if __name__ == "__main__":
    # AdaptationModule(in_dim=8, out_dim=16, stack_size=16, kernel_size=5, hidden_dim=32)
    B, in_dim, stack_size = 2, 8, 16
    out_dim, hidden_dim, kernel_size = 16, 32, 5
    dilations = (1, 2, 4)   # 2**i for the 3 TemporalConvNet levels

    key = jax.random.PRNGKey(0)
    kx, kp = jax.random.split(key)
    # PyTorch input layout is (B, in_dim, stack_size) = NCL
    x_ncl = jax.random.normal(kx, (B, in_dim, stack_size), jnp.float32)
    x_blc = jnp.transpose(x_ncl, (0, 2, 1))   # kernel layout: (B, L, C)

    params = init_params(kp, in_dim, out_dim, hidden_dim, kernel_size)

    # Pack weights once; the per-call hot path is a single jitted pallas_call.
    w_slab, v_slab = pack_params(params, in_dim=in_dim, out_dim=out_dim,
                                 hidden_dim=hidden_dim, kernel_size=kernel_size,
                                 num_blocks=len(dilations))
    fwd = jax.jit(functools.partial(adaptation_forward_packed,
                                    kernel_size=kernel_size, dilations=dilations,
                                    dims=(in_dim, out_dim, hidden_dim)))

    out = jax.block_until_ready(fwd(x_blc, w_slab, v_slab))

    ref = reference_forward(x_blc, params, kernel_size=kernel_size, dilations=dilations)
    ref = jax.block_until_ready(ref)

    max_err = float(jnp.max(jnp.abs(out - ref)))
    assert out.shape == (B, out_dim)
    assert max_err < 5e-2, f"mismatch vs reference, max abs err = {max_err}"
    print("KERNEL_OK")
</pallas_src>

<mosaic_0001>
module attributes {stable_mosaic.version = 11 : i64} {
  func.func @adaptation_kernel(%arg0: memref<2x16x8xf32, #tpu.memory_space<vmem>>, %arg1: memref<360x32xbf16, #tpu.memory_space<vmem>>, %arg2: memref<14x48xf32, #tpu.memory_space<vmem>>, %arg3: memref<2x16xf32, #tpu.memory_space<vmem>>) attributes {dimension_semantics = [], scalar_prefetch = 0 : i64, scratch_operands = 0 : i64, tpu.core_type = #tpu.core_type<tc>} {
    %0 = tpu.iota {dimensions = array<i32: 0>} : vector<32x8xi32>
    %c16_i32 = arith.constant 16 : i32
    %c0_i32 = arith.constant 0 : i32
    %1 = arith.cmpi eq, %c16_i32, %c0_i32 : i32
    %c1_i32 = arith.constant 1 : i32
    %2 = arith.select %1, %c1_i32, %c16_i32 : i32
    %3 = vector.broadcast %2 : i32 to vector<32x8xi32>
    %4 = arith.remsi %0, %3 : vector<32x8xi32>
    %c0_i32_0 = arith.constant 0 : i32
    %5 = vector.broadcast %c0_i32_0 : i32 to vector<32x8xi32>
    %6 = arith.cmpi ne, %4, %5 : vector<32x8xi32>
    %c0_i32_1 = arith.constant 0 : i32
    %7 = vector.broadcast %c0_i32_1 : i32 to vector<32x8xi32>
    %8 = arith.cmpi slt, %4, %7 : vector<32x8xi32>
    %c0_i32_2 = arith.constant 0 : i32
    %9 = arith.cmpi slt, %2, %c0_i32_2 : i32
    %10 = vector.broadcast %9 : i1 to vector<32x8xi1>
    %11 = vector.broadcast %10 : vector<32x8xi1> to vector<32x8xi1>
    %12 = arith.xori %8, %11 : vector<32x8xi1>
    %13 = arith.andi %12, %6 : vector<32x8xi1>
    %14 = vector.broadcast %2 : i32 to vector<32x8xi32>
    %15 = arith.addi %4, %14 : vector<32x8xi32>
    %16 = arith.select %13, %15, %4 : vector<32x8xi1>, vector<32x8xi32>
    %c1_i32_3 = arith.constant 1 : i32
    %17 = vector.broadcast %c1_i32_3 : i32 to vector<32x8xi32>
    %18 = arith.cmpi sge, %16, %17 : vector<32x8xi32>
    %c2_i32 = arith.constant 2 : i32
    %19 = vector.broadcast %c2_i32 : i32 to vector<32x8xi32>
    %20 = arith.cmpi sge, %16, %19 : vector<32x8xi32>
    %c3_i32 = arith.constant 3 : i32
    %21 = vector.broadcast %c3_i32 : i32 to vector<32x8xi32>
    %22 = arith.cmpi sge, %16, %21 : vector<32x8xi32>
    %c4_i32 = arith.constant 4 : i32
    %23 = vector.broadcast %c4_i32 : i32 to vector<32x8xi32>
    %24 = arith.cmpi sge, %16, %23 : vector<32x8xi32>
    %c6_i32 = arith.constant 6 : i32
    %25 = vector.broadcast %c6_i32 : i32 to vector<32x8xi32>
    %26 = arith.cmpi sge, %16, %25 : vector<32x8xi32>
    %c8_i32 = arith.constant 8 : i32
    %27 = vector.broadcast %c8_i32 : i32 to vector<32x8xi32>
    %28 = arith.cmpi sge, %16, %27 : vector<32x8xi32>
    %c12_i32 = arith.constant 12 : i32
    %29 = vector.broadcast %c12_i32 : i32 to vector<32x8xi32>
    %30 = arith.cmpi sge, %16, %29 : vector<32x8xi32>
    %c0 = arith.constant 0 : index
    %c0_4 = arith.constant 0 : index
    %c0_5 = arith.constant 0 : index
    %31 = vector.load %arg0[%c0, %c0_4, %c0_5] : memref<2x16x8xf32, #tpu.memory_space<vmem>>, vector<2x16x8xf32>
    %32 = vector.shape_cast %31 : vector<2x16x8xf32> to vector<32x8xf32>
    %c4_i32_6 = arith.constant 4 : i32
    %33 = tpu.dynamic_rotate %32 by %c4_i32_6 dim 0 : vector<32x8xf32>, i32 -> vector<32x8xf32>
    %cst = arith.constant 0.000000e+00 : f32
    %34 = vector.broadcast %cst : f32 to vector<32x8xf32>
    %35 = arith.select %24, %33, %34 : vector<32x8xi1>, vector<32x8xf32>
    %c3_i32_7 = arith.constant 3 : i32
    %36 = tpu.dynamic_rotate %32 by %c3_i32_7 dim 0 : vector<32x8xf32>, i32 -> vector<32x8xf32>
    %cst_8 = arith.constant 0.000000e+00 : f32
    %37 = vector.broadcast %cst_8 : f32 to vector<32x8xf32>
    %38 = arith.select %22, %36, %37 : vector<32x8xi1>, vector<32x8xf32>
    %c2_i32_9 = arith.constant 2 : i32
    %39 = tpu.dynamic_rotate %32 by %c2_i32_9 dim 0 : vector<32x8xf32>, i32 -> vector<32x8xf32>
    %cst_10 = arith.constant 0.000000e+00 : f32
    %40 = vector.broadcast %cst_10 : f32 to vector<32x8xf32>
    %41 = arith.select %20, %39, %40 : vector<32x8xi1>, vector<32x8xf32>
    %c1_i32_11 = arith.constant 1 : i32
    %42 = tpu.dynamic_rotate %32 by %c1_i32_11 dim 0 : vector<32x8xf32>, i32 -> vector<32x8xf32>
    %cst_12 = arith.constant 0.000000e+00 : f32
    %43 = vector.broadcast %cst_12 : f32 to vector<32x8xf32>
    %44 = arith.select %18, %42, %43 : vector<32x8xi1>, vector<32x8xf32>
    %45 = tpu.concatenate %35, %38, %41, %44, %32 in 1 : vector<32x8xf32>, vector<32x8xf32>, vector<32x8xf32>, vector<32x8xf32>, vector<32x8xf32> -> vector<32x40xf32>
    %46 = arith.truncf %45 : vector<32x40xf32> to vector<32x40xbf16>
    %c0_13 = arith.constant 0 : index
    %c0_14 = arith.constant 0 : index
    %47 = vector.load %arg1[%c0_13, %c0_14] : memref<360x32xbf16, #tpu.memory_space<vmem>>, vector<40x8xbf16>
    %cst_15 = arith.constant dense<0.000000e+00> : vector<32x8xf32>
    %48 = tpu.matmul %46, %47, %cst_15 {dimension_numbers = #tpu.dot_dimension_numbers<[1], [0], [0], [1], [0, 0, 1, 1], [], []>} : vector<32x40xbf16>, vector<40x8xbf16>, vector<32x8xf32> -> vector<32x8xf32>
    %c0_16 = arith.constant 0 : index
    %c0_17 = arith.constant 0 : index
    %49 = vector.load %arg2[%c0_16, %c0_17] : memref<14x48xf32, #tpu.memory_space<vmem>>, vector<1x8xf32>
    %50 = vector.broadcast %49 : vector<1x8xf32> to vector<32x8xf32>
    %51 = arith.addf %48, %50 : vector<32x8xf32>
    %cst_18 = arith.constant 0.000000e+00 : f32
    %52 = vector.broadcast %cst_18 : f32 to vector<32x8xf32>
    %53 = arith.maximumf %51, %52 : vector<32x8xf32>
    %c4_i32_19 = arith.constant 4 : i32
    %54 = tpu.dynamic_rotate %53 by %c4_i32_19 dim 0 : vector<32x8xf32>, i32 -> vector<32x8xf32>
    %cst_20 = arith.constant 0.000000e+00 : f32
    %55 = vector.broadcast %cst_20 : f32 to vector<32x8xf32>
    %56 = arith.select %24, %54, %55 : vector<32x8xi1>, vector<32x8xf32>
    %c3_i32_21 = arith.constant 3 : i32
    %57 = tpu.dynamic_rotate %53 by %c3_i32_21 dim 0 : vector<32x8xf32>, i32 -> vector<32x8xf32>
    %cst_22 = arith.constant 0.000000e+00 : f32
    %58 = vector.broadcast %cst_22 : f32 to vector<32x8xf32>
    %59 = arith.select %22, %57, %58 : vector<32x8xi1>, vector<32x8xf32>
    %c2_i32_23 = arith.constant 2 : i32
    %60 = tpu.dynamic_rotate %53 by %c2_i32_23 dim 0 : vector<32x8xf32>, i32 -> vector<32x8xf32>
    %cst_24 = arith.constant 0.000000e+00 : f32
    %61 = vector.broadcast %cst_24 : f32 to vector<32x8xf32>
    %62 = arith.select %20, %60, %61 : vector<32x8xi1>, vector<32x8xf32>
    %c1_i32_25 = arith.constant 1 : i32
    %63 = tpu.dynamic_rotate %53 by %c1_i32_25 dim 0 : vector<32x8xf32>, i32 -> vector<32x8xf32>
    %cst_26 = arith.constant 0.000000e+00 : f32
    %64 = vector.broadcast %cst_26 : f32 to vector<32x8xf32>
    %65 = arith.select %18, %63, %64 : vector<32x8xi1>, vector<32x8xf32>
    %66 = tpu.concatenate %56, %59, %62, %65, %53 in 1 : vector<32x8xf32>, vector<32x8xf32>, vector<32x8xf32>, vector<32x8xf32>, vector<32x8xf32> -> vector<32x40xf32>
    %67 = arith.truncf %66 : vector<32x40xf32> to vector<32x40xbf16>
    %c40 = arith.constant 40 : index
    %c0_27 = arith.constant 0 : index
    %68 = vector.load %arg1[%c40, %c0_27] : memref<360x32xbf16, #tpu.memory_space<vmem>>, vector<40x8xbf16>
    %cst_28 = arith.constant dense<0.000000e+00> : vector<32x8xf32>
    %69 = tpu.matmul %67, %68, %cst_28 {dimension_numbers = #tpu.dot_dimension_numbers<[1], [0], [0], [1], [0, 0, 1, 1], [], []>} : vector<32x40xbf16>, vector<40x8xbf16>, vector<32x8xf32> -> vector<32x8xf32>
    %c1 = arith.constant 1 : index
    %c0_29 = arith.constant 0 : index
    %70 = vector.load %arg2[%c1, %c0_29] : memref<14x48xf32, #tpu.memory_space<vmem>>, vector<1x8xf32>
    %71 = vector.broadcast %70 : vector<1x8xf32> to vector<32x8xf32>
    %72 = arith.addf %69, %71 : vector<32x8xf32>
    %cst_30 = arith.constant 0.000000e+00 : f32
    %73 = vector.broadcast %cst_30 : f32 to vector<32x8xf32>
    %74 = arith.maximumf %72, %73 : vector<32x8xf32>
    %75 = arith.addf %74, %32 : vector<32x8xf32>
    %cst_31 = arith.constant 0.000000e+00 : f32
    %76 = vector.broadcast %cst_31 : f32 to vector<32x8xf32>
    %77 = arith.maximumf %75, %76 : vector<32x8xf32>
    %c8_i32_32 = arith.constant 8 : i32
    %78 = tpu.dynamic_rotate %77 by %c8_i32_32 dim 0 : vector<32x8xf32>, i32 -> vector<32x8xf32>
    %cst_33 = arith.constant 0.000000e+00 : f32
    %79 = vector.broadcast %cst_33 : f32 to vector<32x8xf32>
    %80 = arith.select %28, %78, %79 : vector<32x8xi1>, vector<32x8xf32>
    %c6_i32_34 = arith.constant 6 : i32
    %81 = tpu.dynamic_rotate %77 by %c6_i32_34 dim 0 : vector<32x8xf32>, i32 -> vector<32x8xf32>
    %cst_35 = arith.constant 0.000000e+00 : f32
    %82 = vector.broadcast %cst_35 : f32 to vector<32x8xf32>
    %83 = arith.select %26, %81, %82 : vector<32x8xi1>, vector<32x8xf32>
    %c4_i32_36 = arith.constant 4 : i32
    %84 = tpu.dynamic_rotate %77 by %c4_i32_36 dim 0 : vector<32x8xf32>, i32 -> vector<32x8xf32>
    %cst_37 = arith.constant 0.000000e+00 : f32
    %85 = vector.broadcast %cst_37 : f32 to vector<32x8xf32>
    %86 = arith.select %24, %84, %85 : vector<32x8xi1>, vector<32x8xf32>
    %c2_i32_38 = arith.constant 2 : i32
    %87 = tpu.dynamic_rotate %77 by %c2_i32_38 dim 0 : vector<32x8xf32>, i32 -> vector<32x8xf32>
    %cst_39 = arith.constant 0.000000e+00 : f32
    %88 = vector.broadcast %cst_39 : f32 to vector<32x8xf32>
    %89 = arith.select %20, %87, %88 : vector<32x8xi1>, vector<32x8xf32>
    %90 = tpu.concatenate %80, %83, %86, %89, %77 in 1 : vector<32x8xf32>, vector<32x8xf32>, vector<32x8xf32>, vector<32x8xf32>, vector<32x8xf32> -> vector<32x40xf32>
    %91 = arith.truncf %90 : vector<32x40xf32> to vector<32x40xbf16>
    %c80 = arith.constant 80 : index
    %c0_40 = arith.constant 0 : index
    %92 = vector.load %arg1[%c80, %c0_40] : memref<360x32xbf16, #tpu.memory_space<vmem>>, vector<40x8xbf16>
    %cst_41 = arith.constant dense<0.000000e+00> : vector<32x8xf32>
    %93 = tpu.matmul %91, %92, %cst_41 {dimension_numbers = #tpu.dot_dimension_numbers<[1], [0], [0], [1], [0, 0, 1, 1], [], []>} : vector<32x40xbf16>, vector<40x8xbf16>, vector<32x8xf32> -> vector<32x8xf32>
    %c2 = arith.constant 2 : index
    %c0_42 = arith.constant 0 : index
    %94 = vector.load %arg2[%c2, %c0_42] : memref<14x48xf32, #tpu.memory_space<vmem>>, vector<1x8xf32>
    %95 = vector.broadcast %94 : vector<1x8xf32> to vector<32x8xf32>
    %96 = arith.addf %93, %95 : vector<32x8xf32>
    %cst_43 = arith.constant 0.000000e+00 : f32
    %97 = vector.broadcast %cst_43 : f32 to vector<32x8xf32>
    %98 = arith.maximumf %96, %97 : vector<32x8xf32>
    %c8_i32_44 = arith.constant 8 : i32
    %99 = tpu.dynamic_rotate %98 by %c8_i32_44 dim 0 : vector<32x8xf32>, i32 -> vector<32x8xf32>
    %cst_45 = arith.constant 0.000000e+00 : f32
    %100 = vector.broadcast %cst_45 : f32 to vector<32x8xf32>
    %101 = arith.select %28, %99, %100 : vector<32x8xi1>, vector<32x8xf32>
    %c6_i32_46 = arith.constant 6 : i32
    %102 = tpu.dynamic_rotate %98 by %c6_i32_46 dim 0 : vector<32x8xf32>, i32 -> vector<32x8xf32>
    %cst_47 = arith.constant 0.000000e+00 : f32
    %103 = vector.broadcast %cst_47 : f32 to vector<32x8xf32>
    %104 = arith.select %26, %102, %103 : vector<32x8xi1>, vector<32x8xf32>
    %c4_i32_48 = arith.constant 4 : i32
    %105 = tpu.dynamic_rotate %98 by %c4_i32_48 dim 0 : vector<32x8xf32>, i32 -> vector<32x8xf32>
    %cst_49 = arith.constant 0.000000e+00 : f32
    %106 = vector.broadcast %cst_49 : f32 to vector<32x8xf32>
    %107 = arith.select %24, %105, %106 : vector<32x8xi1>, vector<32x8xf32>
    %c2_i32_50 = arith.constant 2 : i32
    %108 = tpu.dynamic_rotate %98 by %c2_i32_50 dim 0 : vector<32x8xf32>, i32 -> vector<32x8xf32>
    %cst_51 = arith.constant 0.000000e+00 : f32
    %109 = vector.broadcast %cst_51 : f32 to vector<32x8xf32>
    %110 = arith.select %20, %108, %109 : vector<32x8xi1>, vector<32x8xf32>
    %111 = tpu.concatenate %101, %104, %107, %110, %98 in 1 : vector<32x8xf32>, vector<32x8xf32>, vector<32x8xf32>, vector<32x8xf32>, vector<32x8xf32> -> vector<32x40xf32>
    %112 = arith.truncf %111 : vector<32x40xf32> to vector<32x40xbf16>
    %c120 = arith.constant 120 : index
    %c0_52 = arith.constant 0 : index
    %113 = vector.load %arg1[%c120, %c0_52] : memref<360x32xbf16, #tpu.memory_space<vmem>>, vector<40x8xbf16>
    %cst_53 = arith.constant dense<0.000000e+00> : vector<32x8xf32>
    %114 = tpu.matmul %112, %113, %cst_53 {dimension_numbers = #tpu.dot_dimension_numbers<[1], [0], [0], [1], [0, 0, 1, 1], [], []>} : vector<32x40xbf16>, vector<40x8xbf16>, vector<32x8xf32> -> vector<32x8xf32>
    %c3 = arith.constant 3 : index
    %c0_54 = arith.constant 0 : index
    %115 = vector.load %arg2[%c3, %c0_54] : memref<14x48xf32, #tpu.memory_space<vmem>>, vector<1x8xf32>
    %116 = vector.broadcast %115 : vector<1x8xf32> to vector<32x8xf32>
    %117 = arith.addf %114, %116 : vector<32x8xf32>
    %cst_55 = arith.constant 0.000000e+00 : f32
    %118 = vector.broadcast %cst_55 : f32 to vector<32x8xf32>
    %119 = arith.maximumf %117, %118 : vector<32x8xf32>
    %120 = arith.addf %119, %77 : vector<32x8xf32>
    %cst_56 = arith.constant 0.000000e+00 : f32
    %121 = vector.broadcast %cst_56 : f32 to vector<32x8xf32>
    %122 = arith.maximumf %120, %121 : vector<32x8xf32>
    %cst_57 = arith.constant 0.000000e+00 : f32
    %123 = vector.broadcast %cst_57 : f32 to vector<32x8xf32>
    %c12_i32_58 = arith.constant 12 : i32
    %124 = tpu.dynamic_rotate %122 by %c12_i32_58 dim 0 : vector<32x8xf32>, i32 -> vector<32x8xf32>
    %cst_59 = arith.constant 0.000000e+00 : f32
    %125 = vector.broadcast %cst_59 : f32 to vector<32x8xf32>
    %126 = arith.select %30, %124, %125 : vector<32x8xi1>, vector<32x8xf32>
    %c8_i32_60 = arith.constant 8 : i32
    %127 = tpu.dynamic_rotate %122 by %c8_i32_60 dim 0 : vector<32x8xf32>, i32 -> vector<32x8xf32>
    %cst_61 = arith.constant 0.000000e+00 : f32
    %128 = vector.broadcast %cst_61 : f32 to vector<32x8xf32>
    %129 = arith.select %28, %127, %128 : vector<32x8xi1>, vector<32x8xf32>
    %c4_i32_62 = arith.constant 4 : i32
    %130 = tpu.dynamic_rotate %122 by %c4_i32_62 dim 0 : vector<32x8xf32>, i32 -> vector<32x8xf32>
    %cst_63 = arith.constant 0.000000e+00 : f32
    %131 = vector.broadcast %cst_63 : f32 to vector<32x8xf32>
    %132 = arith.select %24, %130, %131 : vector<32x8xi1>, vector<32x8xf32>
    %133 = tpu.concatenate %123, %126, %129, %132, %122 in 1 : vector<32x8xf32>, vector<32x8xf32>, vector<32x8xf32>, vector<32x8xf32>, vector<32x8xf32> -> vector<32x40xf32>
    %134 = arith.truncf %133 : vector<32x40xf32> to vector<32x40xbf16>
    %c160 = arith.constant 160 : index
    %c0_64 = arith.constant 0 : index
    %135 = vector.load %arg1[%c160, %c0_64] : memref<360x32xbf16, #tpu.memory_space<vmem>>, vector<40x8xbf16>
    %cst_65 = arith.constant dense<0.000000e+00> : vector<32x8xf32>
    %136 = tpu.matmul %134, %135, %cst_65 {dimension_numbers = #tpu.dot_dimension_numbers<[1], [0], [0], [1], [0, 0, 1, 1], [], []>} : vector<32x40xbf16>, vector<40x8xbf16>, vector<32x8xf32> -> vector<32x8xf32>
    %c4 = arith.constant 4 : index
    %c0_66 = arith.constant 0 : index
    %137 = vector.load %arg2[%c4, %c0_66] : memref<14x48xf32, #tpu.memory_space<vmem>>, vector<1x8xf32>
    %138 = vector.broadcast %137 : vector<1x8xf32> to vector<32x8xf32>
    %139 = arith.addf %136, %138 : vector<32x8xf32>
    %cst_67 = arith.constant 0.000000e+00 : f32
    %140 = vector.broadcast %cst_67 : f32 to vector<32x8xf32>
    %141 = arith.maximumf %139, %140 : vector<32x8xf32>
    %cst_68 = arith.constant 0.000000e+00 : f32
    %142 = vector.broadcast %cst_68 : f32 to vector<32x8xf32>
    %c12_i32_69 = arith.constant 12 : i32
    %143 = tpu.dynamic_rotate %141 by %c12_i32_69 dim 0 : vector<32x8xf32>, i32 -> vector<32x8xf32>
    %cst_70 = arith.constant 0.000000e+00 : f32
    %144 = vector.broadcast %cst_70 : f32 to vector<32x8xf32>
    %145 = arith.select %30, %143, %144 : vector<32x8xi1>, vector<32x8xf32>
    %c8_i32_71 = arith.constant 8 : i32
    %146 = tpu.dynamic_rotate %141 by %c8_i32_71 dim 0 : vector<32x8xf32>, i32 -> vector<32x8xf32>
    %cst_72 = arith.constant 0.000000e+00 : f32
    %147 = vector.broadcast %cst_72 : f32 to vector<32x8xf32>
    %148 = arith.select %28, %146, %147 : vector<32x8xi1>, vector<32x8xf32>
    %c4_i32_73 = arith.constant 4 : i32
    %149 = tpu.dynamic_rotate %141 by %c4_i32_73 dim 0 : vector<32x8xf32>, i32 -> vector<32x8xf32>
    %cst_74 = arith.constant 0.000000e+00 : f32
    %150 = vector.broadcast %cst_74 : f32 to vector<32x8xf32>
    %151 = arith.select %24, %149, %150 : vector<32x8xi1>, vector<32x8xf32>
    %152 = tpu.concatenate %142, %145, %148, %151, %141 in 1 : vector<32x8xf32>, vector<32x8xf32>, vector<32x8xf32>, vector<32x8xf32>, vector<32x8xf32> -> vector<32x40xf32>
    %153 = arith.truncf %152 : vector<32x40xf32> to vector<32x40xbf16>
    %c200 = arith.constant 200 : index
    %c0_75 = arith.constant 0 : index
    %154 = vector.load %arg1[%c200, %c0_75] : memref<360x32xbf16, #tpu.memory_space<vmem>>, vector<40x8xbf16>
    %cst_76 = arith.constant dense<0.000000e+00> : vector<32x8xf32>
    %155 = tpu.matmul %153, %154, %cst_76 {dimension_numbers = #tpu.dot_dimension_numbers<[1], [0], [0], [1], [0, 0, 1, 1], [], []>} : vector<32x40xbf16>, vector<40x8xbf16>, vector<32x8xf32> -> vector<32x8xf32>
    %c5 = arith.constant 5 : index
    %c0_77 = arith.constant 0 : index
    %156 = vector.load %arg2[%c5, %c0_77] : memref<14x48xf32, #tpu.memory_space<vmem>>, vector<1x8xf32>
    %157 = vector.broadcast %156 : vector<1x8xf32> to vector<32x8xf32>
    %158 = arith.addf %155, %157 : vector<32x8xf32>
    %cst_78 = arith.constant 0.000000e+00 : f32
    %159 = vector.broadcast %cst_78 : f32 to vector<32x8xf32>
    %160 = arith.maximumf %158, %159 : vector<32x8xf32>
    %161 = arith.addf %160, %122 : vector<32x8xf32>
    %cst_79 = arith.constant 0.000000e+00 : f32
    %162 = vector.broadcast %cst_79 : f32 to vector<32x8xf32>
    %163 = arith.maximumf %161, %162 : vector<32x8xf32>
    %164 = vector.shape_cast %163 : vector<32x8xf32> to vector<2x16x8xf32>
    %165 = vector.extract_strided_slice %164 {offsets = [0, 15, 0], sizes = [2, 1, 8], strides = [1, 1, 1]} : vector<2x16x8xf32> to vector<2x1x8xf32>
    %166 = vector.shape_cast %165 : vector<2x1x8xf32> to vector<2x8xf32>
    %167 = arith.truncf %166 : vector<2x8xf32> to vector<2x8xbf16>
    %c240 = arith.constant 240 : index
    %c0_80 = arith.constant 0 : index
    %168 = vector.load %arg1[%c240, %c0_80] : memref<360x32xbf16, #tpu.memory_space<vmem>>, vector<8x16xbf16>
    %cst_81 = arith.constant dense<0.000000e+00> : vector<2x16xf32>
    %169 = tpu.matmul %167, %168, %cst_81 {dimension_numbers = #tpu.dot_dimension_numbers<[1], [0], [0], [1], [0, 0, 1, 1], [], []>} : vector<2x8xbf16>, vector<8x16xbf16>, vector<2x16xf32> -> vector<2x16xf32>
    %c6 = arith.constant 6 : index
    %c0_82 = arith.constant 0 : index
    %170 = vector.load %arg2[%c6, %c0_82] : memref<14x48xf32, #tpu.memory_space<vmem>>, vector<1x16xf32>
    %171 = vector.broadcast %170 : vector<1x16xf32> to vector<2x16xf32>
    %172 = arith.addf %169, %171 : vector<2x16xf32>
    %173 = arith.truncf %172 : vector<2x16xf32> to vector<2x16xbf16>
    %c248 = arith.constant 248 : index
    %c0_83 = arith.constant 0 : index
    %174 = vector.load %arg1[%c248, %c0_83] : memref<360x32xbf16, #tpu.memory_space<vmem>>, vector<16x32xbf16>
    %cst_84 = arith.constant dense<0.000000e+00> : vector<2x32xf32>
    %175 = tpu.matmul %173, %174, %cst_84 {dimension_numbers = #tpu.dot_dimension_numbers<[1], [0], [0], [1], [0, 0, 1, 1], [], []>} : vector<2x16xbf16>, vector<16x32xbf16>, vector<2x32xf32> -> vector<2x32xf32>
    %c7 = arith.constant 7 : index
    %c0_85 = arith.constant 0 : index
    %176 = vector.load %arg2[%c7, %c0_85] : memref<14x48xf32, #tpu.memory_space<vmem>>, vector<1x32xf32>
    %177 = vector.broadcast %176 : vector<1x32xf32> to vector<2x32xf32>
    %178 = arith.addf %175, %177 : vector<2x32xf32>
    %cst_86 = arith.constant 0.000000e+00 : f32
    %179 = vector.broadcast %cst_86 : f32 to vector<2x32xf32>
    %180 = arith.cmpf ogt, %178, %179 : vector<2x32xf32>
    %181 = math.exp %178 : vector<2x32xf32>
    %cst_87 = arith.constant 1.000000e+00 : f32
    %182 = vector.broadcast %cst_87 : f32 to vector<2x32xf32>
    %183 = arith.subf %181, %182 : vector<2x32xf32>
    %cst_88 = arith.constant 1.67326319 : f32
    %184 = vector.broadcast %cst_88 : f32 to vector<2x32xf32>
    %185 = arith.mulf %184, %183 : vector<2x32xf32>
    %186 = arith.select %180, %178, %185 : vector<2x32xi1>, vector<2x32xf32>
    %cst_89 = arith.constant 1.05070102 : f32
    %187 = vector.broadcast %cst_89 : f32 to vector<2x32xf32>
    %188 = arith.mulf %187, %186 : vector<2x32xf32>
    %189 = tpu.concatenate %188, %172 in 1 : vector<2x32xf32>, vector<2x16xf32> -> vector<2x48xf32>
    %cst_90 = arith.constant dense<0.000000e+00> : vector<2xf32>
    %190 = vector.multi_reduction <add>, %189, %cst_90 [1] : vector<2x48xf32> to vector<2xf32>
    %191 = vector.shape_cast %190 : vector<2xf32> to vector<2x1xf32>
    %cst_91 = arith.constant 4.800000e+01 : f32
    %192 = vector.broadcast %cst_91 : f32 to vector<2x1xf32>
    %193 = arith.divf %191, %192 : vector<2x1xf32>
    %194 = vector.broadcast %193 : vector<2x1xf32> to vector<2x48xf32>
    %195 = arith.subf %189, %194 : vector<2x48xf32>
    %196 = arith.mulf %195, %195 : vector<2x48xf32>
    %cst_92 = arith.constant dense<0.000000e+00> : vector<2xf32>
    %197 = vector.multi_reduction <add>, %196, %cst_92 [1] : vector<2x48xf32> to vector<2xf32>
    %198 = vector.shape_cast %197 : vector<2xf32> to vector<2x1xf32>
    %cst_93 = arith.constant 4.800000e+01 : f32
    %199 = vector.broadcast %cst_93 : f32 to vector<2x1xf32>
    %200 = arith.divf %198, %199 : vector<2x1xf32>
    %cst_94 = arith.constant 9.99999974E-6 : f32
    %201 = vector.broadcast %cst_94 : f32 to vector<2x1xf32>
    %202 = arith.addf %200, %201 : vector<2x1xf32>
    %203 = math.rsqrt %202 : vector<2x1xf32>
    %204 = vector.broadcast %203 : vector<2x1xf32> to vector<2x48xf32>
    %205 = arith.mulf %195, %204 : vector<2x48xf32>
    %c10 = arith.constant 10 : index
    %c0_95 = arith.constant 0 : index
    %206 = vector.load %arg2[%c10, %c0_95] : memref<14x48xf32, #tpu.memory_space<vmem>>, vector<1x48xf32>
    %207 = vector.broadcast %206 : vector<1x48xf32> to vector<2x48xf32>
    %208 = arith.mulf %205, %207 : vector<2x48xf32>
    %c11 = arith.constant 11 : index
    %c0_96 = arith.constant 0 : index
    %209 = vector.load %arg2[%c11, %c0_96] : memref<14x48xf32, #tpu.memory_space<vmem>>, vector<1x48xf32>
    %210 = vector.broadcast %209 : vector<1x48xf32> to vector<2x48xf32>
    %211 = arith.addf %208, %210 : vector<2x48xf32>
    %212 = arith.truncf %211 : vector<2x48xf32> to vector<2x48xbf16>
    %c264 = arith.constant 264 : index
    %c0_97 = arith.constant 0 : index
    %213 = vector.load %arg1[%c264, %c0_97] : memref<360x32xbf16, #tpu.memory_space<vmem>>, vector<48x32xbf16>
    %cst_98 = arith.constant dense<0.000000e+00> : vector<2x32xf32>
    %214 = tpu.matmul %212, %213, %cst_98 {dimension_numbers = #tpu.dot_dimension_numbers<[1], [0], [0], [1], [0, 0, 1, 1], [], []>} : vector<2x48xbf16>, vector<48x32xbf16>, vector<2x32xf32> -> vector<2x32xf32>
    %c8 = arith.constant 8 : index
    %c0_99 = arith.constant 0 : index
    %215 = vector.load %arg2[%c8, %c0_99] : memref<14x48xf32, #tpu.memory_space<vmem>>, vector<1x32xf32>
    %216 = vector.broadcast %215 : vector<1x32xf32> to vector<2x32xf32>
    %217 = arith.addf %214, %216 : vector<2x32xf32>
    %cst_100 = arith.constant 0.000000e+00 : f32
    %218 = vector.broadcast %cst_100 : f32 to vector<2x32xf32>
    %219 = arith.cmpf ogt, %217, %218 : vector<2x32xf32>
    %220 = math.exp %217 : vector<2x32xf32>
    %cst_101 = arith.constant 1.000000e+00 : f32
    %221 = vector.broadcast %cst_101 : f32 to vector<2x32xf32>
    %222 = arith.subf %220, %221 : vector<2x32xf32>
    %cst_102 = arith.constant 1.67326319 : f32
    %223 = vector.broadcast %cst_102 : f32 to vector<2x32xf32>
    %224 = arith.mulf %223, %222 : vector<2x32xf32>
    %225 = arith.select %219, %217, %224 : vector<2x32xi1>, vector<2x32xf32>
    %cst_103 = arith.constant 1.05070102 : f32
    %226 = vector.broadcast %cst_103 : f32 to vector<2x32xf32>
    %227 = arith.mulf %226, %225 : vector<2x32xf32>
    %228 = tpu.concatenate %227, %172 in 1 : vector<2x32xf32>, vector<2x16xf32> -> vector<2x48xf32>
    %cst_104 = arith.constant dense<0.000000e+00> : vector<2xf32>
    %229 = vector.multi_reduction <add>, %228, %cst_104 [1] : vector<2x48xf32> to vector<2xf32>
    %230 = vector.shape_cast %229 : vector<2xf32> to vector<2x1xf32>
    %cst_105 = arith.constant 4.800000e+01 : f32
    %231 = vector.broadcast %cst_105 : f32 to vector<2x1xf32>
    %232 = arith.divf %230, %231 : vector<2x1xf32>
    %233 = vector.broadcast %232 : vector<2x1xf32> to vector<2x48xf32>
    %234 = arith.subf %228, %233 : vector<2x48xf32>
    %235 = arith.mulf %234, %234 : vector<2x48xf32>
    %cst_106 = arith.constant dense<0.000000e+00> : vector<2xf32>
    %236 = vector.multi_reduction <add>, %235, %cst_106 [1] : vector<2x48xf32> to vector<2xf32>
    %237 = vector.shape_cast %236 : vector<2xf32> to vector<2x1xf32>
    %cst_107 = arith.constant 4.800000e+01 : f32
    %238 = vector.broadcast %cst_107 : f32 to vector<2x1xf32>
    %239 = arith.divf %237, %238 : vector<2x1xf32>
    %cst_108 = arith.constant 9.99999974E-6 : f32
    %240 = vector.broadcast %cst_108 : f32 to vector<2x1xf32>
    %241 = arith.addf %239, %240 : vector<2x1xf32>
    %242 = math.rsqrt %241 : vector<2x1xf32>
    %243 = vector.broadcast %242 : vector<2x1xf32> to vector<2x48xf32>
    %244 = arith.mulf %234, %243 : vector<2x48xf32>
    %c12 = arith.constant 12 : index
    %c0_109 = arith.constant 0 : index
    %245 = vector.load %arg2[%c12, %c0_109] : memref<14x48xf32, #tpu.memory_space<vmem>>, vector<1x48xf32>
    %246 = vector.broadcast %245 : vector<1x48xf32> to vector<2x48xf32>
    %247 = arith.mulf %244, %246 : vector<2x48xf32>
    %c13 = arith.constant 13 : index
    %c0_110 = arith.constant 0 : index
    %248 = vector.load %arg2[%c13, %c0_110] : memref<14x48xf32, #tpu.memory_space<vmem>>, vector<1x48xf32>
    %249 = vector.broadcast %248 : vector<1x48xf32> to vector<2x48xf32>
    %250 = arith.addf %247, %249 : vector<2x48xf32>
    %251 = arith.truncf %250 : vector<2x48xf32> to vector<2x48xbf16>
    %c312 = arith.constant 312 : index
    %c0_111 = arith.constant 0 : index
    %252 = vector.load %arg1[%c312, %c0_111] : memref<360x32xbf16, #tpu.memory_space<vmem>>, vector<48x16xbf16>
    %cst_112 = arith.constant dense<0.000000e+00> : vector<2x16xf32>
    %253 = tpu.matmul %251, %252, %cst_112 {dimension_numbers = #tpu.dot_dimension_numbers<[1], [0], [0], [1], [0, 0, 1, 1], [], []>} : vector<2x48xbf16>, vector<48x16xbf16>, vector<2x16xf32> -> vector<2x16xf32>
    %c9 = arith.constant 9 : index
    %c0_113 = arith.constant 0 : index
    %254 = vector.load %arg2[%c9, %c0_113] : memref<14x48xf32, #tpu.memory_space<vmem>>, vector<1x16xf32>
    %255 = vector.broadcast %254 : vector<1x16xf32> to vector<2x16xf32>
    %256 = arith.addf %253, %255 : vector<2x16xf32>
    %c0_114 = arith.constant 0 : index
    %c0_115 = arith.constant 0 : index
    %257 = vector.load %arg3[%c0_114, %c0_115] : memref<2x16xf32, #tpu.memory_space<vmem>>, vector<2x16xf32>
    tpu.vector_store %arg3[%c0_114, %c0_115], %256 {strides = array<i32>} : memref<2x16xf32, #tpu.memory_space<vmem>>, vector<2x16xf32>,
    return
  }
}

</mosaic_0001>

<llo_original>
// kernel: adaptation_forward_packed.1
$region0: #{adaptation_forward_packed.1}
  #allocation0 [shape = 'u32[]', space=smem, size = 0x4, offset = 0x4, fixed_abs, tag = 'smem constant byte address 0x4 - core index']
  #allocation1 [shape = 'u32[144,128]{1,0:T(1,128)}', space=vmem, size = 0x12000, scoped, tag = 'internal scratch']
  %s0 = inlined_call_operand.vmem [shape: f32[2,16,8], index: 0, kind: input, shape index: {}]
  %s1 = inlined_call_operand.vmem [shape: bf16[360,32], index: 1, kind: input, shape index: {}]
  %s2 = inlined_call_operand.vmem [shape: f32[14,48], index: 2, kind: input, shape index: {}]
  %s3 = inlined_call_operand.hbm [shape: f32[2,16], index: 3, kind: output, shape index: {}]
  %s4 = sld [smem:[#allocation0]]
  $region22: #{adaptation_forward_packed.1} parent=0
    _
  %s6 = ssub.s32 1, %s4
  %s7 = scalar_select 0, %s6, %s4
  $region1: #{adaptation_forward_packed.1} parent=0
    #allocation2 [shape = 'u8[1024]{0}', space=vmem, size = 0x400, scoped, tag = 'output window, operand 0, single buffered']
    #allocation3 [shape = 's32[1]{0}', space=sflag, size = 0x4, scoped, tag = 'scoped memory for adaptation_forward_packed.1']
    %8 = vsyncpa [#allocation3], 0
    // Predicated region
    $region2: #{adaptation_forward_packed.1} parent=1 // pred_check
      _
    $region3: #{adaptation_forward_packed.1} parent=1 // pred_check_branch
      %10 = sbr.rel (0) target = $region5
    $region4: #{adaptation_forward_packed.1} parent=1 // pred_region
      _
    $region5: #{adaptation_forward_packed.1} parent=1 // pred_fallthru
      _
    // Predicated region
    $region6: #{adaptation_forward_packed.1} parent=1 // pred_check
      _
    $region7: #{adaptation_forward_packed.1} parent=1 // pred_check_branch
      %12 = sbr.rel (0) target = $region9
    $region8: #{adaptation_forward_packed.1} parent=1 // pred_region
      _
    $region9: #{adaptation_forward_packed.1} parent=1 // pred_fallthru
      _
    // Predicated region
    $region10: #{adaptation_forward_packed.1} parent=1 // pred_check
      _
    $region11: #{adaptation_forward_packed.1} parent=1 // pred_check_branch
      %14 = sbr.rel (0) target = $region13
    $region12: #{adaptation_forward_packed.1} parent=1 // pred_region
      _
    $region13: #{adaptation_forward_packed.1} parent=1 // pred_fallthru
      _
    %v16 = vlaneseq
    %v17 = vshrl.u32 %v16, 7
    %v18 = vadd.s32 %v17, 8
    %v19 = vadd.s32 %v17, 16
    %v20 = vadd.s32 %v17, 24
    %vm21 = vcmp.lt.s32.totalorder %v17, 0
    %v22 = vsub.s32 0, %v17
    %v23 = vsel %vm21, %v22, %v17
    %v24 = vshrl.u32 %v23, 4
    %v25 = vand.u32 %v23, 15
    %v26 = vsub.s32 0, %v25
    %v27 = vsel %vm21, %v26, %v25
    %vm28 = vcmp.lt.s32.totalorder %v18, 0
    %v29 = vsub.s32 0, %v18
    %v30 = vsel %vm28, %v29, %v18
    %v31 = vshrl.u32 %v30, 4
    %v32 = vand.u32 %v30, 15
    %v33 = vsub.s32 0, %v32
    %v34 = vsel %vm28, %v33, %v32
    %vm35 = vcmp.lt.s32.totalorder %v19, 0
    %v36 = vsub.s32 0, %v19
    %v37 = vsel %vm35, %v36, %v19
    %v38 = vshrl.u32 %v37, 4
    %v39 = vand.u32 %v37, 15
    %v40 = vsub.s32 0, %v39
    %v41 = vsel %vm35, %v40, %v39
    %vm42 = vcmp.lt.s32.totalorder %v20, 0
    %v43 = vsub.s32 0, %v20
    %v44 = vsel %vm42, %v43, %v20
    %v45 = vshrl.u32 %v44, 4
    %v46 = vand.u32 %v44, 15
    %v47 = vsub.s32 0, %v46
    %v48 = vsel %vm42, %v47, %v46
    %vm49 = vcmp.ne.s32.totalorder %v27, 0
    %vm50 = vcmp.ne.s32.totalorder %v34, 0
    %vm51 = vcmp.ne.s32.totalorder %v41, 0
    %vm52 = vcmp.ne.s32.totalorder %v48, 0
    %vm53 = vcmp.lt.s32.totalorder %v27, 0
    %vm54 = vcmp.lt.s32.totalorder %v34, 0
    %vm55 = vcmp.lt.s32.totalorder %v41, 0
    %vm56 = vcmp.lt.s32.totalorder %v48, 0
    %vm57 = vmand %vm53, %vm49
    %vm58 = vmand %vm54, %vm50
    %vm59 = vmand %vm55, %vm51
    %vm60 = vmand %vm56, %vm52
    %v61 = vadd.s32 %v27, 16
    %v62 = vadd.s32 %v34, 16
    %v63 = vadd.s32 %v41, 16
    %v64 = vadd.s32 %v48, 16
    %v65 = vsel %vm57, %v61, %v27
    %v66 = vsel %vm58, %v62, %v34
    %v67 = vsel %vm59, %v63, %v41
    %v68 = vsel %vm60, %v64, %v48
    %vm69 = vcmp.ge.s32.totalorder %v65, 1
    %vm70 = vcmp.ge.s32.totalorder %v66, 1
    %vm71 = vcmp.ge.s32.totalorder %v67, 1
    %vm72 = vcmp.ge.s32.totalorder %v68, 1
    %vm73 = vcmp.ge.s32.totalorder %v65, 2
    %vm74 = vcmp.ge.s32.totalorder %v66, 2
    %vm75 = vcmp.ge.s32.totalorder %v67, 2
    %vm76 = vcmp.ge.s32.totalorder %v68, 2
    %vm77 = vcmp.ge.s32.totalorder %v65, 3
    %vm78 = vcmp.ge.s32.totalorder %v66, 3
    %vm79 = vcmp.ge.s32.totalorder %v67, 3
    %vm80 = vcmp.ge.s32.totalorder %v68, 3
    %vm81 = vcmp.ge.s32.totalorder %v65, 4
    %vm82 = vcmp.ge.s32.totalorder %v66, 4
    %vm83 = vcmp.ge.s32.totalorder %v67, 4
    %vm84 = vcmp.ge.s32.totalorder %v68, 4
    %vm85 = vcmp.ge.s32.totalorder %v65, 6
    %vm86 = vcmp.ge.s32.totalorder %v66, 6
    %vm87 = vcmp.ge.s32.totalorder %v67, 6
    %vm88 = vcmp.ge.s32.totalorder %v68, 6
    %vm89 = vcmp.ge.s32.totalorder %v65, 8
    %vm90 = vcmp.ge.s32.totalorder %v66, 8
    %vm91 = vcmp.ge.s32.totalorder %v67, 8
    %vm92 = vcmp.ge.s32.totalorder %v68, 8
    %vm93 = vcmp.ge.s32.totalorder %v65, 12
    %vm94 = vcmp.ge.s32.totalorder %v66, 12
    %vm95 = vcmp.ge.s32.totalorder %v67, 12
    %vm96 = vcmp.ge.s32.totalorder %v68, 12
    %v97 = vld [vmem:[%s0] sm:$0xff]
    %v98 = vld [vmem:[%s0 + $0x8] sm:$0xff]
    %v99 = vld [vmem:[%s0 + $0x10] sm:$0xff]
    %v100 = vld [vmem:[%s0 + $0x18] sm:$0xff]
    %v101 = vrot.slane %v97, 4
    %v102 = vrot.slane %v98, 4
    %v103 = vrot.slane %v99, 4
    %v104 = vrot.slane %v100, 4
    %vm105 = vcmp.lt.s32.totalorder %v17, 4
    %v106 = vsel %vm105, %v103, %v104
    %v107 = vsel %vm105, %v102, %v103
    %v108 = vsel %vm105, %v101, %v102
    %v109 = vsel %vm105, %v104, %v101
    %v110 = vsel %vm81, %v109, 0.0
    %v111 = vsel %vm82, %v108, 0.0
    %v112 = vsel %vm83, %v107, 0.0
    %v113 = vsel %vm84, %v106, 0.0
    %v114 = vrot.slane %v97, 5
    %v115 = vrot.slane %v98, 5
    %v116 = vrot.slane %v99, 5
    %v117 = vrot.slane %v100, 5
    %vm118 = vcmp.lt.s32.totalorder %v17, 3
    %v119 = vsel %vm118, %v116, %v117
    %v120 = vsel %vm118, %v115, %v116
    %v121 = vsel %vm118, %v114, %v115
    %v122 = vsel %vm118, %v117, %v114
    %v123 = vsel %vm77, %v122, 0.0
    %v124 = vsel %vm78, %v121, 0.0
    %v125 = vsel %vm79, %v120, 0.0
    %v126 = vsel %vm80, %v119, 0.0
    %v127 = vrot.slane %v97, 6
    %v128 = vrot.slane %v98, 6
    %v129 = vrot.slane %v99, 6
    %v130 = vrot.slane %v100, 6
    %vm131 = vcmp.lt.s32.totalorder %v17, 2
    %v132 = vsel %vm131, %v129, %v130
    %v133 = vsel %vm131, %v128, %v129
    %v134 = vsel %vm131, %v127, %v128
    %v135 = vsel %vm131, %v130, %v127
    %v136 = vsel %vm73, %v135, 0.0
    %v137 = vsel %vm74, %v134, 0.0
    %v138 = vsel %vm75, %v133, 0.0
    %v139 = vsel %vm76, %v132, 0.0
    %v140 = vrot.slane %v97, 7
    %v141 = vrot.slane %v98, 7
    %v142 = vrot.slane %v99, 7
    %v143 = vrot.slane %v100, 7
    %vm144 = vcmp.lt.s32.totalorder %v17, 1
    %v145 = vsel %vm144, %v142, %v143
    %v146 = vsel %vm144, %v141, %v142
    %v147 = vsel %vm144, %v140, %v141
    %v148 = vsel %vm144, %v143, %v140
    %v149 = vsel %vm69, %v148, 0.0
    %v150 = vsel %vm70, %v147, 0.0
    %v151 = vsel %vm71, %v146, 0.0
    %v152 = vsel %vm72, %v145, 0.0
    %157 = vrot.lane.b32.xlu0 %v123, 8
    %v158 = vpop.permute.xlu0 %157
    %159 = vrot.lane.b32.xlu0 %v124, 8
    %v160 = vpop.permute.xlu0 %159
    %161 = vrot.lane.b32.xlu0 %v125, 8
    %v162 = vpop.permute.xlu0 %161
    %163 = vrot.lane.b32.xlu0 %v126, 8
    %v164 = vpop.permute.xlu0 %163
    %173 = vrot.lane.b32.xlu0 %v136, 16
    %v174 = vpop.permute.xlu0 %173
    %175 = vrot.lane.b32.xlu0 %v137, 16
    %v176 = vpop.permute.xlu0 %175
    %177 = vrot.lane.b32.xlu0 %v138, 16
    %v178 = vpop.permute.xlu0 %177
    %179 = vrot.lane.b32.xlu0 %v139, 16
    %v180 = vpop.permute.xlu0 %179
    %189 = vrot.lane.b32.xlu0 %v149, 24
    %v190 = vpop.permute.xlu0 %189
    %191 = vrot.lane.b32.xlu0 %v150, 24
    %v192 = vpop.permute.xlu0 %191
    %193 = vrot.lane.b32.xlu0 %v151, 24
    %v194 = vpop.permute.xlu0 %193
    %195 = vrot.lane.b32.xlu0 %v152, 24
    %v196 = vpop.permute.xlu0 %195
    %205 = vrot.lane.b32.xlu0 %v97, 32
    %v206 = vpop.permute.xlu0 %205
    %207 = vrot.lane.b32.xlu0 %v98, 32
    %v208 = vpop.permute.xlu0 %207
    %209 = vrot.lane.b32.xlu0 %v99, 32
    %v210 = vpop.permute.xlu0 %209
    %211 = vrot.lane.b32.xlu0 %v100, 32
    %v212 = vpop.permute.xlu0 %211
    %vm217 = vcmask 64512
    %v218 = vsel %vm217, %v110, %v158
    %v219 = vsel %vm217, %v111, %v160
    %v220 = vsel %vm217, %v112, %v162
    %v221 = vsel %vm217, %v113, %v164
    %vm222 = vcmask 130048
    %v223 = vsel %vm222, %v218, %v174
    %v224 = vsel %vm222, %v219, %v176
    %v225 = vsel %vm222, %v220, %v178
    %v226 = vsel %vm222, %v221, %v180
    %vm227 = vcmask 195584
    %v228 = vsel %vm227, %v223, %v190
    %v229 = vsel %vm227, %v224, %v192
    %v230 = vsel %vm227, %v225, %v194
    %v231 = vsel %vm227, %v226, %v196
    %vm232 = vcmask 261120
    %v233 = vsel %vm232, %v228, %v206
    %v234 = vsel %vm232, %v229, %v208
    %v235 = vsel %vm232, %v230, %v210
    %v236 = vsel %vm232, %v231, %v212
    %v237 = vpack.c.bf16 %v234, %v233
    %v238 = vpack.c.bf16 %v236, %v235
    %v239 = vld [vmem:[%s1] sm:$0xf]
    %v240 = vld [vmem:[%s1 + $0x4] sm:$0xf]
    %v241 = vld [vmem:[%s1 + $0x8] sm:$0xf]
    %v242 = vld [vmem:[%s1 + $0xc] sm:$0xf]
    %v243 = vld [vmem:[%s1 + $0x10] sm:$0xf]
    %v244 = vld [vmem:[%s2] sm:$0x1]
    %v245 = vlaneseq
    %v246 = vshrl.u32 %v245, 7
    %v247 = vsub.s32 0, %v246
    %v248 = vrot.slane %v244, %v247
    %v254 = vunpack.c.l.b16 %v239
    %v255 = vunpack.c.l.b16 %v240
    %v256 = vunpack.c.l.b16 %v241
    %v257 = vunpack.c.l.b16 %v242
    %v258 = vunpack.c.l.b16 %v243
    %v259 = vpack.c.b16 %v255, %v254
    %v260 = vpack.c.b16 %v257, %v256
    %v261 = vpack.c.b16 %v258, %v258
    %vm264 = vcmask 326656
    %v266 = vsel %vm264, %v237, 0
    %v269 = vsel %vm264, %v238, 0
    %vm271 = vcmask 1043456
    %v273 = vsel %vm271, %v261, 0
    %275 = vmatprep.subr.bf16.mxu0 0
    %276 = vmatpush1.bf16.msra.mxu0 0
    %277 = vmatprep.subr.bf16.mxu0 0
    %278 = vmatpush1.bf16.msra.mxu0 0
    %279 = vmatprep.subr.bf16.mxu0 0
    %280 = vmatpush1.bf16.msra.mxu0 0
    %281 = vmatprep.subr.bf16.mxu0 0
    %282 = vmatpush1.bf16.msra.mxu0 0
    %283 = vmatprep.subr.bf16.mxu0 0
    %284 = vmatpush1.bf16.msra.mxu0 0
    %285 = vmatprep.subr.bf16.mxu0 0
    %286 = vmatpush1.bf16.msra.mxu0 %v273
    %287 = vmatprep.subr.bf16.mxu0 0
    %288 = vmatpush1.bf16.msra.mxu0 %v260
    %289 = vmatprep.subr.bf16.mxu0 0
    %290 = vmatpush1.bf16.msra.mxu0 %v259
    %291 = vmatprep.subr.bf16.mxu0 0
    %292 = vmatpush2.bf16.msra.mxu0 0
    %293 = vmatprep.subr.bf16.mxu0 0
    %294 = vmatpush2.bf16.msra.mxu0 0
    %295 = vmatprep.subr.bf16.mxu0 0
    %296 = vmatpush2.bf16.msra.mxu0 0
    %297 = vmatprep.subr.bf16.mxu0 0
    %298 = vmatpush2.bf16.msra.mxu0 0
    %299 = vmatprep.subr.bf16.mxu0 0
    %300 = vmatpush2.bf16.msra.mxu0 0
    %301 = vmatprep.subr.bf16.mxu0 0
    %302 = vmatpush2.bf16.msra.mxu0 0
    %303 = vmatprep.subr.bf16.mxu0 0
    %304 = vmatpush2.bf16.msra.mxu0 0
    %305 = vmatprep.subr.bf16.mxu0 0
    %306 = vmatpush2.bf16.msra.mxu0 0
    %307 = vmatprep.mubr.bf16.mxu0 0
    %308 = vmatmul.mubr.bf16.gmra.mxu0 %v266
    %v309 = vpop.f32.mrf.mxu0
    %v310 = vadd.f32 %v248, %v309
    %v311 = vpop.f32.mrf.mxu0
    %v312 = vpop.f32.mrf.mxu0
    %v313 = vadd.f32 %v248, %v312
    %v314 = vpop.f32.mrf.mxu0
    %315 = vmatprep.mubr.bf16.mxu0 0
    %316 = vmatmul.mubr.bf16.gmra.mxu0 %v269
    %v317 = vpop.f32.mrf.mxu0
    %v318 = vadd.f32 %v248, %v317
    %v319 = vpop.f32.mrf.mxu0
    %v320 = vpop.f32.mrf.mxu0
    %v321 = vadd.f32 %v248, %v320
    %v322 = vpop.f32.mrf.mxu0
    %323 = vdwg.mxu0
    %v324 = vmax.f32 %v310, 0.0
    %v325 = vmax.f32 %v313, 0.0
    %v326 = vmax.f32 %v318, 0.0
    %v327 = vmax.f32 %v321, 0.0
    %v328 = vrot.slane %v324, 4
    %v329 = vrot.slane %v325, 4
    %v330 = vrot.slane %v326, 4
    %v331 = vrot.slane %v327, 4
    %v332 = vsel %vm105, %v330, %v331
    %v333 = vsel %vm105, %v329, %v330
    %v334 = vsel %vm105, %v328, %v329
    %v335 = vsel %vm105, %v331, %v328
    %v336 = vsel %vm81, %v335, 0.0
    %v337 = vsel %vm82, %v334, 0.0
    %v338 = vsel %vm83, %v333, 0.0
    %v339 = vsel %vm84, %v332, 0.0
    %v340 = vrot.slane %v324, 5
    %v341 = vrot.slane %v325, 5
    %v342 = vrot.slane %v326, 5
    %v343 = vrot.slane %v327, 5
    %v344 = vsel %vm118, %v342, %v343
    %v345 = vsel %vm118, %v341, %v342
    %v346 = vsel %vm118, %v340, %v341
    %v347 = vsel %vm118, %v343, %v340
    %v348 = vsel %vm77, %v347, 0.0
    %v349 = vsel %vm78, %v346, 0.0
    %v350 = vsel %vm79, %v345, 0.0
    %v351 = vsel %vm80, %v344, 0.0
    %v352 = vrot.slane %v324, 6
    %v353 = vrot.slane %v325, 6
    %v354 = vrot.slane %v326, 6
    %v355 = vrot.slane %v327, 6
    %v356 = vsel %vm131, %v354, %v355
    %v357 = vsel %vm131, %v353, %v354
    %v358 = vsel %vm131, %v352, %v353
    %v359 = vsel %vm131, %v355, %v352
    %v360 = vsel %vm73, %v359, 0.0
    %v361 = vsel %vm74, %v358, 0.0
    %v362 = vsel %vm75, %v357, 0.0
    %v363 = vsel %vm76, %v356, 0.0
    %v364 = vrot.slane %v324, 7
    %v365 = vrot.slane %v325, 7
    %v366 = vrot.slane %v326, 7
    %v367 = vrot.slane %v327, 7
    %v368 = vsel %vm144, %v366, %v367
    %v369 = vsel %vm144, %v365, %v366
    %v370 = vsel %vm144, %v364, %v365
    %v371 = vsel %vm144, %v367, %v364
    %v372 = vsel %vm69, %v371, 0.0
    %v373 = vsel %vm70, %v370, 0.0
    %v374 = vsel %vm71, %v369, 0.0
    %v375 = vsel %vm72, %v368, 0.0
    %380 = vrot.lane.b32.xlu0 %v348, 8
    %v381 = vpop.permute.xlu0 %380
    %382 = vrot.lane.b32.xlu0 %v349, 8
    %v383 = vpop.permute.xlu0 %382
    %384 = vrot.lane.b32.xlu0 %v350, 8
    %v385 = vpop.permute.xlu0 %384
    %386 = vrot.lane.b32.xlu0 %v351, 8
    %v387 = vpop.permute.xlu0 %386
    %396 = vrot.lane.b32.xlu0 %v360, 16
    %v397 = vpop.permute.xlu0 %396
    %398 = vrot.lane.b32.xlu0 %v361, 16
    %v399 = vpop.permute.xlu0 %398
    %400 = vrot.lane.b32.xlu0 %v362, 16
    %v401 = vpop.permute.xlu0 %400
    %402 = vrot.lane.b32.xlu0 %v363, 16
    %v403 = vpop.permute.xlu0 %402
    %412 = vrot.lane.b32.xlu0 %v372, 24
    %v413 = vpop.permute.xlu0 %412
    %414 = vrot.lane.b32.xlu0 %v373, 24
    %v415 = vpop.permute.xlu0 %414
    %416 = vrot.lane.b32.xlu0 %v374, 24
    %v417 = vpop.permute.xlu0 %416
    %418 = vrot.lane.b32.xlu0 %v375, 24
    %v419 = vpop.permute.xlu0 %418
    %428 = vrot.lane.b32.xlu0 %v324, 32
    %v429 = vpop.permute.xlu0 %428
    %430 = vrot.lane.b32.xlu0 %v325, 32
    %v431 = vpop.permute.xlu0 %430
    %432 = vrot.lane.b32.xlu0 %v326, 32
    %v433 = vpop.permute.xlu0 %432
    %434 = vrot.lane.b32.xlu0 %v327, 32
    %v435 = vpop.permute.xlu0 %434
    %v440 = vsel %vm217, %v336, %v381
    %v441 = vsel %vm217, %v337, %v383
    %v442 = vsel %vm217, %v338, %v385
    %v443 = vsel %vm217, %v339, %v387
    %v444 = vsel %vm222, %v440, %v397
    %v445 = vsel %vm222, %v441, %v399
    %v446 = vsel %vm222, %v442, %v401
    %v447 = vsel %vm222, %v443, %v403
    %v448 = vsel %vm227, %v444, %v413
    %v449 = vsel %vm227, %v445, %v415
    %v450 = vsel %vm227, %v446, %v417
    %v451 = vsel %vm227, %v447, %v419
    %v452 = vsel %vm232, %v448, %v429
    %v453 = vsel %vm232, %v449, %v431
    %v454 = vsel %vm232, %v450, %v433
    %v455 = vsel %vm232, %v451, %v435
    %v456 = vpack.c.bf16 %v453, %v452
    %v457 = vpack.c.bf16 %v455, %v454
    %v458 = vld [vmem:[%s1 + $0x14] sm:$0xf]
    %v459 = vld [vmem:[%s1 + $0x18] sm:$0xf]
    %v460 = vld [vmem:[%s1 + $0x1c] sm:$0xf]
    %v461 = vld [vmem:[%s1 + $0x20] sm:$0xf]
    %v462 = vld [vmem:[%s1 + $0x24] sm:$0xf]
    %v463 = vld [vmem:[%s2 + $0x1] sm:$0x1]
    %v464 = vlaneseq
    %v465 = vshrl.u32 %v464, 7
    %v466 = vsub.s32 0, %v465
    %v467 = vrot.slane %v463, %v466
    %v473 = vunpack.c.l.b16 %v458
    %v474 = vunpack.c.l.b16 %v459
    %v475 = vunpack.c.l.b16 %v460
    %v476 = vunpack.c.l.b16 %v461
    %v477 = vunpack.c.l.b16 %v462
    %v478 = vpack.c.b16 %v474, %v473
    %v479 = vpack.c.b16 %v476, %v475
    %v480 = vpack.c.b16 %v477, %v477
    %v484 = vsel %vm264, %v456, 0
    %v487 = vsel %vm264, %v457, 0
    %v490 = vsel %vm271, %v480, 0
    %492 = vmatprep.subr.bf16.mxu0 0
    %493 = vmatpush1.bf16.msra.mxu0 0
    %494 = vmatprep.subr.bf16.mxu0 0
    %495 = vmatpush1.bf16.msra.mxu0 0
    %496 = vmatprep.subr.bf16.mxu0 0
    %497 = vmatpush1.bf16.msra.mxu0 0
    %498 = vmatprep.subr.bf16.mxu0 0
    %499 = vmatpush1.bf16.msra.mxu0 0
    %500 = vmatprep.subr.bf16.mxu0 0
    %501 = vmatpush1.bf16.msra.mxu0 0
    %502 = vmatprep.subr.bf16.mxu0 0
    %503 = vmatpush1.bf16.msra.mxu0 %v490
    %504 = vmatprep.subr.bf16.mxu0 0
    %505 = vmatpush1.bf16.msra.mxu0 %v479
    %506 = vmatprep.subr.bf16.mxu0 0
    %507 = vmatpush1.bf16.msra.mxu0 %v478
    %508 = vmatprep.subr.bf16.mxu0 0
    %509 = vmatpush2.bf16.msra.mxu0 0
    %510 = vmatprep.subr.bf16.mxu0 0
    %511 = vmatpush2.bf16.msra.mxu0 0
    %512 = vmatprep.subr.bf16.mxu0 0
    %513 = vmatpush2.bf16.msra.mxu0 0
    %514 = vmatprep.subr.bf16.mxu0 0
    %515 = vmatpush2.bf16.msra.mxu0 0
    %516 = vmatprep.subr.bf16.mxu0 0
    %517 = vmatpush2.bf16.msra.mxu0 0
    %518 = vmatprep.subr.bf16.mxu0 0
    %519 = vmatpush2.bf16.msra.mxu0 0
    %520 = vmatprep.subr.bf16.mxu0 0
    %521 = vmatpush2.bf16.msra.mxu0 0
    %522 = vmatprep.subr.bf16.mxu0 0
    %523 = vmatpush2.bf16.msra.mxu0 0
    %524 = vmatprep.mubr.bf16.mxu0 0
    %525 = vmatmul.mubr.bf16.gmra.mxu0 %v484
    %v526 = vpop.f32.mrf.mxu0
    %v527 = vadd.f32 %v467, %v526
    %v528 = vpop.f32.mrf.mxu0
    %v529 = vpop.f32.mrf.mxu0
    %v530 = vadd.f32 %v467, %v529
    %v531 = vpop.f32.mrf.mxu0
    %532 = vmatprep.mubr.bf16.mxu0 0
    %533 = vmatmul.mubr.bf16.gmra.mxu0 %v487
    %v534 = vpop.f32.mrf.mxu0
    %v535 = vadd.f32 %v467, %v534
    %v536 = vpop.f32.mrf.mxu0
    %v537 = vpop.f32.mrf.mxu0
    %v538 = vadd.f32 %v467, %v537
    %v539 = vpop.f32.mrf.mxu0
    %540 = vdwg.mxu0
    %v541 = vmax.f32 %v527, 0.0
    %v542 = vmax.f32 %v530, 0.0
    %v543 = vmax.f32 %v535, 0.0
    %v544 = vmax.f32 %v538, 0.0
    %v545 = vadd.f32 %v541, %v97
    %v546 = vadd.f32 %v542, %v98
    %v547 = vadd.f32 %v543, %v99
    %v548 = vadd.f32 %v544, %v100
    %v549 = vmax.f32 %v545, 0.0
    %v550 = vmax.f32 %v546, 0.0
    %v551 = vmax.f32 %v547, 0.0
    %v552 = vmax.f32 %v548, 0.0
    %v553 = vsel %vm89, %v552, 0.0
    %v554 = vsel %vm90, %v549, 0.0
    %v555 = vsel %vm91, %v550, 0.0
    %v556 = vsel %vm92, %v551, 0.0
    %v557 = vrot.slane %v549, 2
    %v558 = vrot.slane %v550, 2
    %v559 = vrot.slane %v551, 2
    %v560 = vrot.slane %v552, 2
    %vm561 = vcmp.lt.s32.totalorder %v17, 6
    %v562 = vsel %vm561, %v559, %v560
    %v563 = vsel %vm561, %v558, %v559
    %v564 = vsel %vm561, %v557, %v558
    %v565 = vsel %vm561, %v560, %v557
    %v566 = vsel %vm85, %v565, 0.0
    %v567 = vsel %vm86, %v564, 0.0
    %v568 = vsel %vm87, %v563, 0.0
    %v569 = vsel %vm88, %v562, 0.0
    %v570 = vrot.slane %v549, 4
    %v571 = vrot.slane %v550, 4
    %v572 = vrot.slane %v551, 4
    %v573 = vrot.slane %v552, 4
    %v574 = vsel %vm105, %v572, %v573
    %v575 = vsel %vm105, %v571, %v572
    %v576 = vsel %vm105, %v570, %v571
    %v577 = vsel %vm105, %v573, %v570
    %v578 = vsel %vm81, %v577, 0.0
    %v579 = vsel %vm82, %v576, 0.0
    %v580 = vsel %vm83, %v575, 0.0
    %v581 = vsel %vm84, %v574, 0.0
    %v582 = vrot.slane %v549, 6
    %v583 = vrot.slane %v550, 6
    %v584 = vrot.slane %v551, 6
    %v585 = vrot.slane %v552, 6
    %v586 = vsel %vm131, %v584, %v585
    %v587 = vsel %vm131, %v583, %v584
    %v588 = vsel %vm131, %v582, %v583
    %v589 = vsel %vm131, %v585, %v582
    %v590 = vsel %vm73, %v589, 0.0
    %v591 = vsel %vm74, %v588, 0.0
    %v592 = vsel %vm75, %v587, 0.0
    %v593 = vsel %vm76, %v586, 0.0
    %598 = vrot.lane.b32.xlu0 %v566, 8
    %v599 = vpop.permute.xlu0 %598
    %600 = vrot.lane.b32.xlu0 %v567, 8
    %v601 = vpop.permute.xlu0 %600
    %602 = vrot.lane.b32.xlu0 %v568, 8
    %v603 = vpop.permute.xlu0 %602
    %604 = vrot.lane.b32.xlu0 %v569, 8
    %v605 = vpop.permute.xlu0 %604
    %614 = vrot.lane.b32.xlu0 %v578, 16
    %v615 = vpop.permute.xlu0 %614
    %616 = vrot.lane.b32.xlu0 %v579, 16
    %v617 = vpop.permute.xlu0 %616
    %618 = vrot.lane.b32.xlu0 %v580, 16
    %v619 = vpop.permute.xlu0 %618
    %620 = vrot.lane.b32.xlu0 %v581, 16
    %v621 = vpop.permute.xlu0 %620
    %630 = vrot.lane.b32.xlu0 %v590, 24
    %v631 = vpop.permute.xlu0 %630
    %632 = vrot.lane.b32.xlu0 %v591, 24
    %v633 = vpop.permute.xlu0 %632
    %634 = vrot.lane.b32.xlu0 %v592, 24
    %v635 = vpop.permute.xlu0 %634
    %636 = vrot.lane.b32.xlu0 %v593, 24
    %v637 = vpop.permute.xlu0 %636
    %646 = vrot.lane.b32.xlu0 %v549, 32
    %v647 = vpop.permute.xlu0 %646
    %648 = vrot.lane.b32.xlu0 %v550, 32
    %v649 = vpop.permute.xlu0 %648
    %650 = vrot.lane.b32.xlu0 %v551, 32
    %v651 = vpop.permute.xlu0 %650
    %652 = vrot.lane.b32.xlu0 %v552, 32
    %v653 = vpop.permute.xlu0 %652
    %v658 = vsel %vm217, %v553, %v599
    %v659 = vsel %vm217, %v554, %v601
    %v660 = vsel %vm217, %v555, %v603
    %v661 = vsel %vm217, %v556, %v605
    %v662 = vsel %vm222, %v658, %v615
    %v663 = vsel %vm222, %v659, %v617
    %v664 = vsel %vm222, %v660, %v619
    %v665 = vsel %vm222, %v661, %v621
    %v666 = vsel %vm227, %v662, %v631
    %v667 = vsel %vm227, %v663, %v633
    %v668 = vsel %vm227, %v664, %v635
    %v669 = vsel %vm227, %v665, %v637
    %v670 = vsel %vm232, %v666, %v647
    %v671 = vsel %vm232, %v667, %v649
    %v672 = vsel %vm232, %v668, %v651
    %v673 = vsel %vm232, %v669, %v653
    %v674 = vpack.c.bf16 %v671, %v670
    %v675 = vpack.c.bf16 %v673, %v672
    %v676 = vld [vmem:[%s1 + $0x28] sm:$0xf]
    %v677 = vld [vmem:[%s1 + $0x2c] sm:$0xf]
    %v678 = vld [vmem:[%s1 + $0x30] sm:$0xf]
    %v679 = vld [vmem:[%s1 + $0x34] sm:$0xf]
    %v680 = vld [vmem:[%s1 + $0x38] sm:$0xf]
    %v681 = vld [vmem:[%s2 + $0x2] sm:$0x1]
    %v682 = vlaneseq
    %v683 = vshrl.u32 %v682, 7
    %v684 = vsub.s32 0, %v683
    %v685 = vrot.slane %v681, %v684
    %v691 = vunpack.c.l.b16 %v676
    %v692 = vunpack.c.l.b16 %v677
    %v693 = vunpack.c.l.b16 %v678
    %v694 = vunpack.c.l.b16 %v679
    %v695 = vunpack.c.l.b16 %v680
    %v696 = vpack.c.b16 %v692, %v691
    %v697 = vpack.c.b16 %v694, %v693
    %v698 = vpack.c.b16 %v695, %v695
    %v702 = vsel %vm264, %v674, 0
    %v705 = vsel %vm264, %v675, 0
    %v708 = vsel %vm271, %v698, 0
    %710 = vmatprep.subr.bf16.mxu0 0
    %711 = vmatpush1.bf16.msra.mxu0 0
    %712 = vmatprep.subr.bf16.mxu0 0
    %713 = vmatpush1.bf16.msra.mxu0 0
    %714 = vmatprep.subr.bf16.mxu0 0
    %715 = vmatpush1.bf16.msra.mxu0 0
    %716 = vmatprep.subr.bf16.mxu0 0
    %717 = vmatpush1.bf16.msra.mxu0 0
    %718 = vmatprep.subr.bf16.mxu0 0
    %719 = vmatpush1.bf16.msra.mxu0 0
    %720 = vmatprep.subr.bf16.mxu0 0
    %721 = vmatpush1.bf16.msra.mxu0 %v708
    %722 = vmatprep.subr.bf16.mxu0 0
    %723 = vmatpush1.bf16.msra.mxu0 %v697
    %724 = vmatprep.subr.bf16.mxu0 0
    %725 = vmatpush1.bf16.msra.mxu0 %v696
    %726 = vmatprep.subr.bf16.mxu0 0
    %727 = vmatpush2.bf16.msra.mxu0 0
    %728 = vmatprep.subr.bf16.mxu0 0
    %729 = vmatpush2.bf16.msra.mxu0 0
    %730 = vmatprep.subr.bf16.mxu0 0
    %731 = vmatpush2.bf16.msra.mxu0 0
    %732 = vmatprep.subr.bf16.mxu0 0
    %733 = vmatpush2.bf16.msra.mxu0 0
    %734 = vmatprep.subr.bf16.mxu0 0
    %735 = vmatpush2.bf16.msra.mxu0 0
    %736 = vmatprep.subr.bf16.mxu0 0
    %737 = vmatpush2.bf16.msra.mxu0 0
    %738 = vmatprep.subr.bf16.mxu0 0
    %739 = vmatpush2.bf16.msra.mxu0 0
    %740 = vmatprep.subr.bf16.mxu0 0
    %741 = vmatpush2.bf16.msra.mxu0 0
    %742 = vmatprep.mubr.bf16.mxu0 0
    %743 = vmatmul.mubr.bf16.gmra.mxu0 %v702
    %v744 = vpop.f32.mrf.mxu0
    %v745 = vadd.f32 %v685, %v744
    %v746 = vpop.f32.mrf.mxu0
    %v747 = vpop.f32.mrf.mxu0
    %v748 = vadd.f32 %v685, %v747
    %v749 = vpop.f32.mrf.mxu0
    %750 = vmatprep.mubr.bf16.mxu0 0
    %751 = vmatmul.mubr.bf16.gmra.mxu0 %v705
    %v752 = vpop.f32.mrf.mxu0
    %v753 = vadd.f32 %v685, %v752
    %v754 = vpop.f32.mrf.mxu0
    %v755 = vpop.f32.mrf.mxu0
    %v756 = vadd.f32 %v685, %v755
    %v757 = vpop.f32.mrf.mxu0
    %758 = vdwg.mxu0
    %v759 = vmax.f32 %v745, 0.0
    %v760 = vmax.f32 %v748, 0.0
    %v761 = vmax.f32 %v753, 0.0
    %v762 = vmax.f32 %v756, 0.0
    %v763 = vsel %vm89, %v762, 0.0
    %v764 = vsel %vm90, %v759, 0.0
    %v765 = vsel %vm91, %v760, 0.0
    %v766 = vsel %vm92, %v761, 0.0
    %v767 = vrot.slane %v759, 2
    %v768 = vrot.slane %v760, 2
    %v769 = vrot.slane %v761, 2
    %v770 = vrot.slane %v762, 2
    %v771 = vsel %vm561, %v769, %v770
    %v772 = vsel %vm561, %v768, %v769
    %v773 = vsel %vm561, %v767, %v768
    %v774 = vsel %vm561, %v770, %v767
    %v775 = vsel %vm85, %v774, 0.0
    %v776 = vsel %vm86, %v773, 0.0
    %v777 = vsel %vm87, %v772, 0.0
    %v778 = vsel %vm88, %v771, 0.0
    %v779 = vrot.slane %v759, 4
    %v780 = vrot.slane %v760, 4
    %v781 = vrot.slane %v761, 4
    %v782 = vrot.slane %v762, 4
    %v783 = vsel %vm105, %v781, %v782
    %v784 = vsel %vm105, %v780, %v781
    %v785 = vsel %vm105, %v779, %v780
    %v786 = vsel %vm105, %v782, %v779
    %v787 = vsel %vm81, %v786, 0.0
    %v788 = vsel %vm82, %v785, 0.0
    %v789 = vsel %vm83, %v784, 0.0
    %v790 = vsel %vm84, %v783, 0.0
    %v791 = vrot.slane %v759, 6
    %v792 = vrot.slane %v760, 6
    %v793 = vrot.slane %v761, 6
    %v794 = vrot.slane %v762, 6
    %v795 = vsel %vm131, %v793, %v794
    %v796 = vsel %vm131, %v792, %v793
    %v797 = vsel %vm131, %v791, %v792
    %v798 = vsel %vm131, %v794, %v791
    %v799 = vsel %vm73, %v798, 0.0
    %v800 = vsel %vm74, %v797, 0.0
    %v801 = vsel %vm75, %v796, 0.0
    %v802 = vsel %vm76, %v795, 0.0
    %807 = vrot.lane.b32.xlu0 %v775, 8
    %v808 = vpop.permute.xlu0 %807
    %809 = vrot.lane.b32.xlu0 %v776, 8
    %v810 = vpop.permute.xlu0 %809
    %811 = vrot.lane.b32.xlu0 %v777, 8
    %v812 = vpop.permute.xlu0 %811
    %813 = vrot.lane.b32.xlu0 %v778, 8
    %v814 = vpop.permute.xlu0 %813
    %823 = vrot.lane.b32.xlu0 %v787, 16
    %v824 = vpop.permute.xlu0 %823
    %825 = vrot.lane.b32.xlu0 %v788, 16
    %v826 = vpop.permute.xlu0 %825
    %827 = vrot.lane.b32.xlu0 %v789, 16
    %v828 = vpop.permute.xlu0 %827
    %829 = vrot.lane.b32.xlu0 %v790, 16
    %v830 = vpop.permute.xlu0 %829
    %839 = vrot.lane.b32.xlu0 %v799, 24
    %v840 = vpop.permute.xlu0 %839
    %841 = vrot.lane.b32.xlu0 %v800, 24
    %v842 = vpop.permute.xlu0 %841
    %843 = vrot.lane.b32.xlu0 %v801, 24
    %v844 = vpop.permute.xlu0 %843
    %845 = vrot.lane.b32.xlu0 %v802, 24
    %v846 = vpop.permute.xlu0 %845
    %855 = vrot.lane.b32.xlu0 %v759, 32
    %v856 = vpop.permute.xlu0 %855
    %857 = vrot.lane.b32.xlu0 %v760, 32
    %v858 = vpop.permute.xlu0 %857
    %859 = vrot.lane.b32.xlu0 %v761, 32
    %v860 = vpop.permute.xlu0 %859
    %861 = vrot.lane.b32.xlu0 %v762, 32
    %v862 = vpop.permute.xlu0 %861
    %v867 = vsel %vm217, %v763, %v808
    %v868 = vsel %vm217, %v764, %v810
    %v869 = vsel %vm217, %v765, %v812
    %v870 = vsel %vm217, %v766, %v814
    %v871 = vsel %vm222, %v867, %v824
    %v872 = vsel %vm222, %v868, %v826
    %v873 = vsel %vm222, %v869, %v828
    %v874 = vsel %vm222, %v870, %v830
    %v875 = vsel %vm227, %v871, %v840
    %v876 = vsel %vm227, %v872, %v842
    %v877 = vsel %vm227, %v873, %v844
    %v878 = vsel %vm227, %v874, %v846
    %v879 = vsel %vm232, %v875, %v856
    %v880 = vsel %vm232, %v876, %v858
    %v881 = vsel %vm232, %v877, %v860
    %v882 = vsel %vm232, %v878, %v862
    %v883 = vpack.c.bf16 %v880, %v879
    %v884 = vpack.c.bf16 %v882, %v881
    %v885 = vld [vmem:[%s1 + $0x3c] sm:$0xf]
    %v886 = vld [vmem:[%s1 + $0x40] sm:$0xf]
    %v887 = vld [vmem:[%s1 + $0x44] sm:$0xf]
    %v888 = vld [vmem:[%s1 + $0x48] sm:$0xf]
    %v889 = vld [vmem:[%s1 + $0x4c] sm:$0xf]
    %v890 = vld [vmem:[%s2 + $0x3] sm:$0x1]
    %v891 = vlaneseq
    %v892 = vshrl.u32 %v891, 7
    %v893 = vsub.s32 0, %v892
    %v894 = vrot.slane %v890, %v893
    %v900 = vunpack.c.l.b16 %v885
    %v901 = vunpack.c.l.b16 %v886
    %v902 = vunpack.c.l.b16 %v887
    %v903 = vunpack.c.l.b16 %v888
    %v904 = vunpack.c.l.b16 %v889
    %v905 = vpack.c.b16 %v901, %v900
    %v906 = vpack.c.b16 %v903, %v902
    %v907 = vpack.c.b16 %v904, %v904
    %v911 = vsel %vm264, %v883, 0
    %v914 = vsel %vm264, %v884, 0
    %v917 = vsel %vm271, %v907, 0
    %919 = vmatprep.subr.bf16.mxu0 0
    %920 = vmatpush1.bf16.msra.mxu0 0
    %921 = vmatprep.subr.bf16.mxu0 0
    %922 = vmatpush1.bf16.msra.mxu0 0
    %923 = vmatprep.subr.bf16.mxu0 0
    %924 = vmatpush1.bf16.msra.mxu0 0
    %925 = vmatprep.subr.bf16.mxu0 0
    %926 = vmatpush1.bf16.msra.mxu0 0
    %927 = vmatprep.subr.bf16.mxu0 0
    %928 = vmatpush1.bf16.msra.mxu0 0
    %929 = vmatprep.subr.bf16.mxu0 0
    %930 = vmatpush1.bf16.msra.mxu0 %v917
    %931 = vmatprep.subr.bf16.mxu0 0
    %932 = vmatpush1.bf16.msra.mxu0 %v906
    %933 = vmatprep.subr.bf16.mxu0 0
    %934 = vmatpush1.bf16.msra.mxu0 %v905
    %935 = vmatprep.subr.bf16.mxu0 0
    %936 = vmatpush2.bf16.msra.mxu0 0
    %937 = vmatprep.subr.bf16.mxu0 0
    %938 = vmatpush2.bf16.msra.mxu0 0
    %939 = vmatprep.subr.bf16.mxu0 0
    %940 = vmatpush2.bf16.msra.mxu0 0
    %941 = vmatprep.subr.bf16.mxu0 0
    %942 = vmatpush2.bf16.msra.mxu0 0
    %943 = vmatprep.subr.bf16.mxu0 0
    %944 = vmatpush2.bf16.msra.mxu0 0
    %945 = vmatprep.subr.bf16.mxu0 0
    %946 = vmatpush2.bf16.msra.mxu0 0
    %947 = vmatprep.subr.bf16.mxu0 0
    %948 = vmatpush2.bf16.msra.mxu0 0
    %949 = vmatprep.subr.bf16.mxu0 0
    %950 = vmatpush2.bf16.msra.mxu0 0
    %951 = vmatprep.mubr.bf16.mxu0 0
    %952 = vmatmul.mubr.bf16.gmra.mxu0 %v911
    %v953 = vpop.f32.mrf.mxu0
    %v954 = vadd.f32 %v894, %v953
    %v955 = vpop.f32.mrf.mxu0
    %v956 = vpop.f32.mrf.mxu0
    %v957 = vadd.f32 %v894, %v956
    %v958 = vpop.f32.mrf.mxu0
    %959 = vmatprep.mubr.bf16.mxu0 0
    %960 = vmatmul.mubr.bf16.gmra.mxu0 %v914
    %v961 = vpop.f32.mrf.mxu0
    %v962 = vadd.f32 %v894, %v961
    %v963 = vpop.f32.mrf.mxu0
    %v964 = vpop.f32.mrf.mxu0
    %v965 = vadd.f32 %v894, %v964
    %v966 = vpop.f32.mrf.mxu0
    %967 = vdwg.mxu0
    %v968 = vmax.f32 %v954, 0.0
    %v969 = vmax.f32 %v957, 0.0
    %v970 = vmax.f32 %v962, 0.0
    %v971 = vmax.f32 %v965, 0.0
    %v972 = vadd.f32 %v968, %v549
    %v973 = vadd.f32 %v969, %v550
    %v974 = vadd.f32 %v970, %v551
    %v975 = vadd.f32 %v971, %v552
    %v976 = vmax.f32 %v972, 0.0
    %v977 = vmax.f32 %v973, 0.0
    %v978 = vmax.f32 %v974, 0.0
    %v979 = vmax.f32 %v975, 0.0
    %v980 = vrot.slane %v976, 4
    %v981 = vrot.slane %v977, 4
    %v982 = vrot.slane %v978, 4
    %v983 = vrot.slane %v979, 4
    %v984 = vsel %vm105, %v982, %v983
    %v985 = vsel %vm105, %v981, %v982
    %v986 = vsel %vm105, %v980, %v981
    %v987 = vsel %vm105, %v983, %v980
    %v988 = vsel %vm93, %v984, 0.0
    %v989 = vsel %vm94, %v987, 0.0
    %v990 = vsel %vm95, %v986, 0.0
    %v991 = vsel %vm96, %v985, 0.0
    %v992 = vsel %vm89, %v979, 0.0
    %v993 = vsel %vm90, %v976, 0.0
    %v994 = vsel %vm91, %v977, 0.0
    %v995 = vsel %vm92, %v978, 0.0
    %v996 = vsel %vm81, %v987, 0.0
    %v997 = vsel %vm82, %v986, 0.0
    %v998 = vsel %vm83, %v985, 0.0
    %v999 = vsel %vm84, %v984, 0.0
    %1004 = vrot.lane.b32.xlu0 %v988, 8
    %v1005 = vpop.permute.xlu0 %1004
    %1006 = vrot.lane.b32.xlu0 %v989, 8
    %v1007 = vpop.permute.xlu0 %1006
    %1008 = vrot.lane.b32.xlu0 %v990, 8
    %v1009 = vpop.permute.xlu0 %1008
    %1010 = vrot.lane.b32.xlu0 %v991, 8
    %v1011 = vpop.permute.xlu0 %1010
    %1020 = vrot.lane.b32.xlu0 %v992, 16
    %v1021 = vpop.permute.xlu0 %1020
    %1022 = vrot.lane.b32.xlu0 %v993, 16
    %v1023 = vpop.permute.xlu0 %1022
    %1024 = vrot.lane.b32.xlu0 %v994, 16
    %v1025 = vpop.permute.xlu0 %1024
    %1026 = vrot.lane.b32.xlu0 %v995, 16
    %v1027 = vpop.permute.xlu0 %1026
    %1036 = vrot.lane.b32.xlu0 %v996, 24
    %v1037 = vpop.permute.xlu0 %1036
    %1038 = vrot.lane.b32.xlu0 %v997, 24
    %v1039 = vpop.permute.xlu0 %1038
    %1040 = vrot.lane.b32.xlu0 %v998, 24
    %v1041 = vpop.permute.xlu0 %1040
    %1042 = vrot.lane.b32.xlu0 %v999, 24
    %v1043 = vpop.permute.xlu0 %1042
    %1052 = vrot.lane.b32.xlu0 %v976, 32
    %v1053 = vpop.permute.xlu0 %1052
    %1054 = vrot.lane.b32.xlu0 %v977, 32
    %v1055 = vpop.permute.xlu0 %1054
    %1056 = vrot.lane.b32.xlu0 %v978, 32
    %v1057 = vpop.permute.xlu0 %1056
    %1058 = vrot.lane.b32.xlu0 %v979, 32
    %v1059 = vpop.permute.xlu0 %1058
    %v1064 = vsel %vm217, 0.0, %v1005
    %v1065 = vsel %vm217, 0.0, %v1007
    %v1066 = vsel %vm217, 0.0, %v1009
    %v1067 = vsel %vm217, 0.0, %v1011
    %v1068 = vsel %vm222, %v1064, %v1021
    %v1069 = vsel %vm222, %v1065, %v1023
    %v1070 = vsel %vm222, %v1066, %v1025
    %v1071 = vsel %vm222, %v1067, %v1027
    %v1072 = vsel %vm227, %v1068, %v1037
    %v1073 = vsel %vm227, %v1069, %v1039
    %v1074 = vsel %vm227, %v1070, %v1041
    %v1075 = vsel %vm227, %v1071, %v1043
    %v1076 = vsel %vm232, %v1072, %v1053
    %v1077 = vsel %vm232, %v1073, %v1055
    %v1078 = vsel %vm232, %v1074, %v1057
    %v1079 = vsel %vm232, %v1075, %v1059
    %v1080 = vpack.c.bf16 %v1077, %v1076
    %v1081 = vpack.c.bf16 %v1079, %v1078
    %v1082 = vld [vmem:[%s1 + $0x50] sm:$0xf]
    %v1083 = vld [vmem:[%s1 + $0x54] sm:$0xf]
    %v1084 = vld [vmem:[%s1 + $0x58] sm:$0xf]
    %v1085 = vld [vmem:[%s1 + $0x5c] sm:$0xf]
    %v1086 = vld [vmem:[%s1 + $0x60] sm:$0xf]
    %v1087 = vld [vmem:[%s2 + $0x4] sm:$0x1]
    %v1088 = vlaneseq
    %v1089 = vshrl.u32 %v1088, 7
    %v1090 = vsub.s32 0, %v1089
    %v1091 = vrot.slane %v1087, %v1090
    %v1097 = vunpack.c.l.b16 %v1082
    %v1098 = vunpack.c.l.b16 %v1083
    %v1099 = vunpack.c.l.b16 %v1084
    %v1100 = vunpack.c.l.b16 %v1085
    %v1101 = vunpack.c.l.b16 %v1086
    %v1102 = vpack.c.b16 %v1098, %v1097
    %v1103 = vpack.c.b16 %v1100, %v1099
    %v1104 = vpack.c.b16 %v1101, %v1101
    %v1108 = vsel %vm264, %v1080, 0
    %v1111 = vsel %vm264, %v1081, 0
    %v1114 = vsel %vm271, %v1104, 0
    %1116 = vmatprep.subr.bf16.mxu0 0
    %1117 = vmatpush1.bf16.msra.mxu0 0
    %1118 = vmatprep.subr.bf16.mxu0 0
    %1119 = vmatpush1.bf16.msra.mxu0 0
    %1120 = vmatprep.subr.bf16.mxu0 0
    %1121 = vmatpush1.bf16.msra.mxu0 0
    %1122 = vmatprep.subr.bf16.mxu0 0
    %1123 = vmatpush1.bf16.msra.mxu0 0
    %1124 = vmatprep.subr.bf16.mxu0 0
    %1125 = vmatpush1.bf16.msra.mxu0 0
    %1126 = vmatprep.subr.bf16.mxu0 0
    %1127 = vmatpush1.bf16.msra.mxu0 %v1114
    %1128 = vmatprep.subr.bf16.mxu0 0
    %1129 = vmatpush1.bf16.msra.mxu0 %v1103
    %1130 = vmatprep.subr.bf16.mxu0 0
    %1131 = vmatpush1.bf16.msra.mxu0 %v1102
    %1132 = vmatprep.subr.bf16.mxu0 0
    %1133 = vmatpush2.bf16.msra.mxu0 0
    %1134 = vmatprep.subr.bf16.mxu0 0
    %1135 = vmatpush2.bf16.msra.mxu0 0
    %1136 = vmatprep.subr.bf16.mxu0 0
    %1137 = vmatpush2.bf16.msra.mxu0 0
    %1138 = vmatprep.subr.bf16.mxu0 0
    %1139 = vmatpush2.bf16.msra.mxu0 0
    %1140 = vmatprep.subr.bf16.mxu0 0
    %1141 = vmatpush2.bf16.msra.mxu0 0
    %1142 = vmatprep.subr.bf16.mxu0 0
    %1143 = vmatpush2.bf16.msra.mxu0 0
    %1144 = vmatprep.subr.bf16.mxu0 0
    %1145 = vmatpush2.bf16.msra.mxu0 0
    %1146 = vmatprep.subr.bf16.mxu0 0
    %1147 = vmatpush2.bf16.msra.mxu0 0
    %1148 = vmatprep.mubr.bf16.mxu0 0
    %1149 = vmatmul.mubr.bf16.gmra.mxu0 %v1108
    %v1150 = vpop.f32.mrf.mxu0
    %v1151 = vadd.f32 %v1091, %v1150
    %v1152 = vpop.f32.mrf.mxu0
    %v1153 = vpop.f32.mrf.mxu0
    %v1154 = vadd.f32 %v1091, %v1153
    %v1155 = vpop.f32.mrf.mxu0
    %1156 = vmatprep.mubr.bf16.mxu0 0
    %1157 = vmatmul.mubr.bf16.gmra.mxu0 %v1111
    %v1158 = vpop.f32.mrf.mxu0
    %v1159 = vadd.f32 %v1091, %v1158
    %v1160 = vpop.f32.mrf.mxu0
    %v1161 = vpop.f32.mrf.mxu0
    %v1162 = vadd.f32 %v1091, %v1161
    %v1163 = vpop.f32.mrf.mxu0
    %1164 = vdwg.mxu0
    %v1165 = vmax.f32 %v1151, 0.0
    %v1166 = vmax.f32 %v1154, 0.0
    %v1167 = vmax.f32 %v1159, 0.0
    %v1168 = vmax.f32 %v1162, 0.0
    %v1169 = vrot.slane %v1165, 4
    %v1170 = vrot.slane %v1166, 4
    %v1171 = vrot.slane %v1167, 4
    %v1172 = vrot.slane %v1168, 4
    %v1173 = vsel %vm105, %v1171, %v1172
    %v1174 = vsel %vm105, %v1170, %v1171
    %v1175 = vsel %vm105, %v1169, %v1170
    %v1176 = vsel %vm105, %v1172, %v1169
    %v1177 = vsel %vm93, %v1173, 0.0
    %v1178 = vsel %vm94, %v1176, 0.0
    %v1179 = vsel %vm95, %v1175, 0.0
    %v1180 = vsel %vm96, %v1174, 0.0
    %v1181 = vsel %vm89, %v1168, 0.0
    %v1182 = vsel %vm90, %v1165, 0.0
    %v1183 = vsel %vm91, %v1166, 0.0
    %v1184 = vsel %vm92, %v1167, 0.0
    %v1185 = vsel %vm81, %v1176, 0.0
    %v1186 = vsel %vm82, %v1175, 0.0
    %v1187 = vsel %vm83, %v1174, 0.0
    %v1188 = vsel %vm84, %v1173, 0.0
    %1193 = vrot.lane.b32.xlu0 %v1177, 8
    %v1194 = vpop.permute.xlu0 %1193
    %1195 = vrot.lane.b32.xlu0 %v1178, 8
    %v1196 = vpop.permute.xlu0 %1195
    %1197 = vrot.lane.b32.xlu0 %v1179, 8
    %v1198 = vpop.permute.xlu0 %1197
    %1199 = vrot.lane.b32.xlu0 %v1180, 8
    %v1200 = vpop.permute.xlu0 %1199
    %1209 = vrot.lane.b32.xlu0 %v1181, 16
    %v1210 = vpop.permute.xlu0 %1209
    %1211 = vrot.lane.b32.xlu0 %v1182, 16
    %v1212 = vpop.permute.xlu0 %1211
    %1213 = vrot.lane.b32.xlu0 %v1183, 16
    %v1214 = vpop.permute.xlu0 %1213
    %1215 = vrot.lane.b32.xlu0 %v1184, 16
    %v1216 = vpop.permute.xlu0 %1215
    %1225 = vrot.lane.b32.xlu0 %v1185, 24
    %v1226 = vpop.permute.xlu0 %1225
    %1227 = vrot.lane.b32.xlu0 %v1186, 24
    %v1228 = vpop.permute.xlu0 %1227
    %1229 = vrot.lane.b32.xlu0 %v1187, 24
    %v1230 = vpop.permute.xlu0 %1229
    %1231 = vrot.lane.b32.xlu0 %v1188, 24
    %v1232 = vpop.permute.xlu0 %1231
    %1241 = vrot.lane.b32.xlu0 %v1165, 32
    %v1242 = vpop.permute.xlu0 %1241
    %1243 = vrot.lane.b32.xlu0 %v1166, 32
    %v1244 = vpop.permute.xlu0 %1243
    %1245 = vrot.lane.b32.xlu0 %v1167, 32
    %v1246 = vpop.permute.xlu0 %1245
    %1247 = vrot.lane.b32.xlu0 %v1168, 32
    %v1248 = vpop.permute.xlu0 %1247
    %v1253 = vsel %vm217, 0.0, %v1194
    %v1254 = vsel %vm217, 0.0, %v1196
    %v1255 = vsel %vm217, 0.0, %v1198
    %v1256 = vsel %vm217, 0.0, %v1200
    %v1257 = vsel %vm222, %v1253, %v1210
    %v1258 = vsel %vm222, %v1254, %v1212
    %v1259 = vsel %vm222, %v1255, %v1214
    %v1260 = vsel %vm222, %v1256, %v1216
    %v1261 = vsel %vm227, %v1257, %v1226
    %v1262 = vsel %vm227, %v1258, %v1228
    %v1263 = vsel %vm227, %v1259, %v1230
    %v1264 = vsel %vm227, %v1260, %v1232
    %v1265 = vsel %vm232, %v1261, %v1242
    %v1266 = vsel %vm232, %v1262, %v1244
    %v1267 = vsel %vm232, %v1263, %v1246
    %v1268 = vsel %vm232, %v1264, %v1248
    %v1269 = vpack.c.bf16 %v1266, %v1265
    %v1270 = vpack.c.bf16 %v1268, %v1267
    %v1271 = vld [vmem:[%s1 + $0x64] sm:$0xf]
    %v1272 = vld [vmem:[%s1 + $0x68] sm:$0xf]
    %v1273 = vld [vmem:[%s1 + $0x6c] sm:$0xf]
    %v1274 = vld [vmem:[%s1 + $0x70] sm:$0xf]
    %v1275 = vld [vmem:[%s1 + $0x74] sm:$0xf]
    %v1276 = vld [vmem:[%s2 + $0x5] sm:$0x1]
    %v1277 = vlaneseq
    %v1278 = vshrl.u32 %v1277, 7
    %v1279 = vsub.s32 0, %v1278
    %v1280 = vrot.slane %v1276, %v1279
    %v1286 = vunpack.c.l.b16 %v1271
    %v1287 = vunpack.c.l.b16 %v1272
    %v1288 = vunpack.c.l.b16 %v1273
    %v1289 = vunpack.c.l.b16 %v1274
    %v1290 = vunpack.c.l.b16 %v1275
    %v1291 = vpack.c.b16 %v1287, %v1286
    %v1292 = vpack.c.b16 %v1289, %v1288
    %v1293 = vpack.c.b16 %v1290, %v1290
    %v1297 = vsel %vm264, %v1269, 0
    %v1300 = vsel %vm264, %v1270, 0
    %v1303 = vsel %vm271, %v1293, 0
    %1305 = vmatprep.subr.bf16.mxu0 0
    %1306 = vmatpush1.bf16.msra.mxu0 0
    %1307 = vmatprep.subr.bf16.mxu0 0
    %1308 = vmatpush1.bf16.msra.mxu0 0
    %1309 = vmatprep.subr.bf16.mxu0 0
    %1310 = vmatpush1.bf16.msra.mxu0 0
    %1311 = vmatprep.subr.bf16.mxu0 0
    %1312 = vmatpush1.bf16.msra.mxu0 0
    %1313 = vmatprep.subr.bf16.mxu0 0
    %1314 = vmatpush1.bf16.msra.mxu0 0
    %1315 = vmatprep.subr.bf16.mxu0 0
    %1316 = vmatpush1.bf16.msra.mxu0 %v1303
    %1317 = vmatprep.subr.bf16.mxu0 0
    %1318 = vmatpush1.bf16.msra.mxu0 %v1292
    %1319 = vmatprep.subr.bf16.mxu0 0
    %1320 = vmatpush1.bf16.msra.mxu0 %v1291
    %1321 = vmatprep.subr.bf16.mxu0 0
    %1322 = vmatpush2.bf16.msra.mxu0 0
    %1323 = vmatprep.subr.bf16.mxu0 0
    %1324 = vmatpush2.bf16.msra.mxu0 0
    %1325 = vmatprep.subr.bf16.mxu0 0
    %1326 = vmatpush2.bf16.msra.mxu0 0
    %1327 = vmatprep.subr.bf16.mxu0 0
    %1328 = vmatpush2.bf16.msra.mxu0 0
    %1329 = vmatprep.subr.bf16.mxu0 0
    %1330 = vmatpush2.bf16.msra.mxu0 0
    %1331 = vmatprep.subr.bf16.mxu0 0
    %1332 = vmatpush2.bf16.msra.mxu0 0
    %1333 = vmatprep.subr.bf16.mxu0 0
    %1334 = vmatpush2.bf16.msra.mxu0 0
    %1335 = vmatprep.subr.bf16.mxu0 0
    %1336 = vmatpush2.bf16.msra.mxu0 0
    %1337 = vmatprep.mubr.bf16.mxu0 0
    %1338 = vmatmul.mubr.bf16.gmra.mxu0 %v1297
    %v1339 = vpop.f32.mrf.mxu0
    %v1340 = vpop.f32.mrf.mxu0
    %v1341 = vpop.f32.mrf.mxu0
    %v1342 = vadd.f32 %v1280, %v1341
    %v1343 = vpop.f32.mrf.mxu0
    %1344 = vmatprep.mubr.bf16.mxu0 0
    %1345 = vmatmul.mubr.bf16.gmra.mxu0 %v1300
    %v1346 = vpop.f32.mrf.mxu0
    %v1347 = vpop.f32.mrf.mxu0
    %v1348 = vpop.f32.mrf.mxu0
    %v1349 = vadd.f32 %v1280, %v1348
    %v1350 = vpop.f32.mrf.mxu0
    %1351 = vdwg.mxu0
    %v1352 = vmax.f32 %v1342, 0.0
    %v1353 = vmax.f32 %v1349, 0.0
    %v1354 = vadd.f32 %v1352, %v977
    %v1355 = vadd.f32 %v1353, %v979
    %v1356 = vmax.f32 %v1354, 0.0
    %v1357 = vmax.f32 %v1355, 0.0
    %v1358 = vpack.c.bf16 %v1356, %v1356
    %v1359 = vpack.c.bf16 %v1357, %v1357
    %v1360 = vld [vmem:[%s1 + $0x78] sm:$0xf]
    %v1361 = vld [vmem:[%s2 + $0x6] sm:$0x1]
    %v1362 = vlaneseq
    %v1363 = vshrl.u32 %v1362, 7
    %v1364 = vsub.s32 0, %v1363
    %v1365 = vrot.slane %v1361, %v1364
    %v1368 = vunpack.c.l.b16 %v1358
    %v1369 = vunpack.c.l.b16 %v1359
    %v1370 = vrot.slane %v1368, 7
    %v1371 = vrot.slane %v1369, 6
    %vm1372 = vcmask 1041409
    %v1373 = vsel %vm1372, %v1371, %v1370
    %v1374 = vpack.c.b16 %v1373, %v1373
    %v1376 = vsel %vm217, %v1374, 0
    %v1379 = vsel %vm271, %v1360, 0
    %1381 = vmatprep.subr.bf16.mxu0 0
    %1382 = vmatpush1.bf16.msra.mxu0 0
    %1383 = vmatprep.subr.bf16.mxu0 0
    %1384 = vmatpush1.bf16.msra.mxu0 0
    %1385 = vmatprep.subr.bf16.mxu0 0
    %1386 = vmatpush1.bf16.msra.mxu0 0
    %1387 = vmatprep.subr.bf16.mxu0 0
    %1388 = vmatpush1.bf16.msra.mxu0 0
    %1389 = vmatprep.subr.bf16.mxu0 0
    %1390 = vmatpush1.bf16.msra.mxu0 0
    %1391 = vmatprep.subr.bf16.mxu0 0
    %1392 = vmatpush1.bf16.msra.mxu0 0
    %1393 = vmatprep.subr.bf16.mxu0 0
    %1394 = vmatpush1.bf16.msra.mxu0 0
    %1395 = vmatprep.subr.bf16.mxu0 0
    %1396 = vmatpush1.bf16.msra.mxu0 %v1379
    %1397 = vmatprep.subr.bf16.mxu0 0
    %1398 = vmatpush2.bf16.msra.mxu0 0
    %1399 = vmatprep.subr.bf16.mxu0 0
    %1400 = vmatpush2.bf16.msra.mxu0 0
    %1401 = vmatprep.subr.bf16.mxu0 0
    %1402 = vmatpush2.bf16.msra.mxu0 0
    %1403 = vmatprep.subr.bf16.mxu0 0
    %1404 = vmatpush2.bf16.msra.mxu0 0
    %1405 = vmatprep.subr.bf16.mxu0 0
    %1406 = vmatpush2.bf16.msra.mxu0 0
    %1407 = vmatprep.subr.bf16.mxu0 0
    %1408 = vmatpush2.bf16.msra.mxu0 0
    %1409 = vmatprep.subr.bf16.mxu0 0
    %1410 = vmatpush2.bf16.msra.mxu0 0
    %1411 = vmatprep.subr.bf16.mxu0 0
    %1412 = vmatpush2.bf16.msra.mxu0 0
    %1413 = vmatprep.mubr.bf16.mxu0 0
    %1414 = vmatmul.mubr.bf16.gmra.mxu0 %v1376
    %v1415 = vpop.f32.mrf.mxu0
    %v1416 = vadd.f32 %v1365, %v1415
    %v1417 = vpop.f32.mrf.mxu0
    %v1418 = vpop.f32.mrf.mxu0
    %v1419 = vpop.f32.mrf.mxu0
    %1420 = vdwg.mxu0
    %v1421 = vpack.c.bf16 %v1416, %v1416
    %v1422 = vld [vmem:[%s1 + $0x7c] sm:$0xf]
    %v1423 = vld [vmem:[%s1 + $0x80] sm:$0xf]
    %v1424 = vld [vmem:[%s2 + $0x7] sm:$0x1]
    %v1425 = vlaneseq
    %v1426 = vshrl.u32 %v1425, 7
    %v1427 = vsub.s32 0, %v1426
    %v1428 = vrot.slane %v1424, %v1427
    %v1431 = vunpack.c.l.b16 %v1422
    %v1432 = vunpack.c.l.b16 %v1423
    %v1433 = vpack.c.b16 %v1432, %v1431
    %v1436 = vsel %vm222, %v1421, 0
    %1438 = vmatprep.subr.bf16.mxu0 0
    %1439 = vmatpush1.bf16.msra.mxu0 0
    %1440 = vmatprep.subr.bf16.mxu0 0
    %1441 = vmatpush1.bf16.msra.mxu0 0
    %1442 = vmatprep.subr.bf16.mxu0 0
    %1443 = vmatpush1.bf16.msra.mxu0 0
    %1444 = vmatprep.subr.bf16.mxu0 0
    %1445 = vmatpush1.bf16.msra.mxu0 0
    %1446 = vmatprep.subr.bf16.mxu0 0
    %1447 = vmatpush1.bf16.msra.mxu0 0
    %1448 = vmatprep.subr.bf16.mxu0 0
    %1449 = vmatpush1.bf16.msra.mxu0 0
    %1450 = vmatprep.subr.bf16.mxu0 0
    %1451 = vmatpush1.bf16.msra.mxu0 0
    %1452 = vmatprep.subr.bf16.mxu0 0
    %1453 = vmatpush1.bf16.msra.mxu0 %v1433
    %1454 = vmatprep.subr.bf16.mxu0 0
    %1455 = vmatpush2.bf16.msra.mxu0 0
    %1456 = vmatprep.subr.bf16.mxu0 0
    %1457 = vmatpush2.bf16.msra.mxu0 0
    %1458 = vmatprep.subr.bf16.mxu0 0
    %1459 = vmatpush2.bf16.msra.mxu0 0
    %1460 = vmatprep.subr.bf16.mxu0 0
    %1461 = vmatpush2.bf16.msra.mxu0 0
    %1462 = vmatprep.subr.bf16.mxu0 0
    %1463 = vmatpush2.bf16.msra.mxu0 0
    %1464 = vmatprep.subr.bf16.mxu0 0
    %1465 = vmatpush2.bf16.msra.mxu0 0
    %1466 = vmatprep.subr.bf16.mxu0 0
    %1467 = vmatpush2.bf16.msra.mxu0 0
    %1468 = vmatprep.subr.bf16.mxu0 0
    %1469 = vmatpush2.bf16.msra.mxu0 0
    %1470 = vmatprep.mubr.bf16.mxu0 0
    %1471 = vmatmul.mubr.bf16.gmra.mxu0 %v1436
    %v1472 = vpop.f32.mrf.mxu0
    %v1473 = vadd.f32 %v1428, %v1472
    %v1474 = vpop.f32.mrf.mxu0
    %v1475 = vpop.f32.mrf.mxu0
    %v1476 = vpop.f32.mrf.mxu0
    %1477 = vdwg.mxu0
    %vm1478 = vcmp.gt.f32.partialorder %v1473, 0.0
    %v1479 = vmul.f32 %v1473, 1.442695
    %v1480 = vpow.pop %v1479
    %v1481 = vsub.f32 %v1480, 1.0
    %v1482 = vmul.f32 %v1481, 1.6732632
    %v1483 = vsel %vm1478, %v1473, %v1482
    %v1484 = vmul.f32 %v1483, 1.050701
    %1486 = vrot.lane.b32.xlu0 %v1416, 32
    %v1487 = vpop.permute.xlu0 %1486
    %v1489 = vsel %vm232, %v1484, %v1487
    %vm1490 = vcmask 386048
    %v1491 = vsel %vm1490, %v1489, 0.0
    %1492 = vadd.xlane.f32.xlu0 %v1491
    %v1493 = vpop.xlane.xlu0 %1492
    %v1494 = vrcp.pop 48.0
    %v1495 = vmul.f32 %v1493, %v1494
    %v1496 = vsub.f32 %v1489, %v1495
    %v1497 = vmul.f32 %v1496, %v1496
    %v1498 = vsel %vm1490, %v1497, 0.0
    %1499 = vadd.xlane.f32.xlu0 %v1498
    %v1500 = vpop.xlane.xlu0 %1499
    %v1501 = vmul.f32 %v1500, %v1494
    %v1502 = vadd.f32 %v1501, 1e-05
    %v1503 = vrsqrt.pop %v1502
    %v1504 = vmul.f32 %v1496, %v1503
    %v1505 = vld [vmem:[%s2 + $0xa] sm:$0x1]
    %v1506 = vlaneseq
    %v1507 = vshrl.u32 %v1506, 7
    %v1508 = vsub.s32 0, %v1507
    %v1509 = vrot.slane %v1505, %v1508
    %v1510 = vmul.f32 %v1504, %v1509
    %v1511 = vld [vmem:[%s2 + $0xb] sm:$0x1]
    %v1512 = vlaneseq
    %v1513 = vshrl.u32 %v1512, 7
    %v1514 = vsub.s32 0, %v1513
    %v1515 = vrot.slane %v1511, %v1514
    %v1516 = vadd.f32 %v1510, %v1515
    %v1517 = vpack.c.bf16 %v1516, %v1516
    %v1518 = vld [vmem:[%s1 + $0x84] sm:$0xf]
    %v1519 = vld [vmem:[%s1 + $0x88] sm:$0xf]
    %v1520 = vld [vmem:[%s1 + $0x8c] sm:$0xf]
    %v1521 = vld [vmem:[%s1 + $0x90] sm:$0xf]
    %v1522 = vld [vmem:[%s1 + $0x94] sm:$0xf]
    %v1523 = vld [vmem:[%s1 + $0x98] sm:$0xf]
    %v1524 = vld [vmem:[%s2 + $0x8] sm:$0x1]
    %v1525 = vlaneseq
    %v1526 = vshrl.u32 %v1525, 7
    %v1527 = vsub.s32 0, %v1526
    %v1528 = vrot.slane %v1524, %v1527
    %v1535 = vunpack.c.l.b16 %v1518
    %v1536 = vunpack.c.l.b16 %v1519
    %v1537 = vunpack.c.l.b16 %v1520
    %v1538 = vunpack.c.l.b16 %v1521
    %v1539 = vunpack.c.l.b16 %v1522
    %v1540 = vunpack.c.l.b16 %v1523
    %v1541 = vpack.c.b16 %v1536, %v1535
    %v1542 = vpack.c.b16 %v1538, %v1537
    %v1543 = vpack.c.b16 %v1540, %v1539
    %vm1547 = vcmask 392192
    %v1549 = vsel %vm1547, %v1517, 0
    %1551 = vmatprep.subr.bf16.mxu0 0
    %1552 = vmatpush1.bf16.msra.mxu0 0
    %1553 = vmatprep.subr.bf16.mxu0 0
    %1554 = vmatpush1.bf16.msra.mxu0 0
    %1555 = vmatprep.subr.bf16.mxu0 0
    %1556 = vmatpush1.bf16.msra.mxu0 0
    %1557 = vmatprep.subr.bf16.mxu0 0
    %1558 = vmatpush1.bf16.msra.mxu0 0
    %1559 = vmatprep.subr.bf16.mxu0 0
    %1560 = vmatpush1.bf16.msra.mxu0 0
    %1561 = vmatprep.subr.bf16.mxu0 0
    %1562 = vmatpush1.bf16.msra.mxu0 %v1543
    %1563 = vmatprep.subr.bf16.mxu0 0
    %1564 = vmatpush1.bf16.msra.mxu0 %v1542
    %1565 = vmatprep.subr.bf16.mxu0 0
    %1566 = vmatpush1.bf16.msra.mxu0 %v1541
    %1567 = vmatprep.subr.bf16.mxu0 0
    %1568 = vmatpush2.bf16.msra.mxu0 0
    %1569 = vmatprep.subr.bf16.mxu0 0
    %1570 = vmatpush2.bf16.msra.mxu0 0
    %1571 = vmatprep.subr.bf16.mxu0 0
    %1572 = vmatpush2.bf16.msra.mxu0 0
    %1573 = vmatprep.subr.bf16.mxu0 0
    %1574 = vmatpush2.bf16.msra.mxu0 0
    %1575 = vmatprep.subr.bf16.mxu0 0
    %1576 = vmatpush2.bf16.msra.mxu0 0
    %1577 = vmatprep.subr.bf16.mxu0 0
    %1578 = vmatpush2.bf16.msra.mxu0 0
    %1579 = vmatprep.subr.bf16.mxu0 0
    %1580 = vmatpush2.bf16.msra.mxu0 0
    %1581 = vmatprep.subr.bf16.mxu0 0
    %1582 = vmatpush2.bf16.msra.mxu0 0
    %1583 = vmatprep.mubr.bf16.mxu0 0
    %1584 = vmatmul.mubr.bf16.gmra.mxu0 %v1549
    %v1585 = vpop.f32.mrf.mxu0
    %v1586 = vadd.f32 %v1528, %v1585
    %v1587 = vpop.f32.mrf.mxu0
    %v1588 = vpop.f32.mrf.mxu0
    %v1589 = vpop.f32.mrf.mxu0
    %1590 = vdwg.mxu0
    %vm1591 = vcmp.gt.f32.partialorder %v1586, 0.0
    %v1592 = vmul.f32 %v1586, 1.442695
    %v1593 = vpow.pop %v1592
    %v1594 = vsub.f32 %v1593, 1.0
    %v1595 = vmul.f32 %v1594, 1.6732632
    %v1596 = vsel %vm1591, %v1586, %v1595
    %v1597 = vmul.f32 %v1596, 1.050701
    %v1598 = vsel %vm232, %v1597, %v1487
    %v1599 = vsel %vm1490, %v1598, 0.0
    %1600 = vadd.xlane.f32.xlu0 %v1599
    %v1601 = vpop.xlane.xlu0 %1600
    %v1602 = vmul.f32 %v1601, %v1494
    %v1603 = vsub.f32 %v1598, %v1602
    %v1604 = vmul.f32 %v1603, %v1603
    %v1605 = vsel %vm1490, %v1604, 0.0
    %1606 = vadd.xlane.f32.xlu0 %v1605
    %v1607 = vpop.xlane.xlu0 %1606
    %v1608 = vmul.f32 %v1607, %v1494
    %v1609 = vadd.f32 %v1608, 1e-05
    %v1610 = vrsqrt.pop %v1609
    %v1611 = vmul.f32 %v1603, %v1610
    %v1612 = vld [vmem:[%s2 + $0xc] sm:$0x1]
    %v1613 = vlaneseq
    %v1614 = vshrl.u32 %v1613, 7
    %v1615 = vsub.s32 0, %v1614
    %v1616 = vrot.slane %v1612, %v1615
    %v1617 = vmul.f32 %v1611, %v1616
    %v1618 = vld [vmem:[%s2 + $0xd] sm:$0x1]
    %v1619 = vlaneseq
    %v1620 = vshrl.u32 %v1619, 7
    %v1621 = vsub.s32 0, %v1620
    %v1622 = vrot.slane %v1618, %v1621
    %v1623 = vadd.f32 %v1617, %v1622
    %v1624 = vpack.c.bf16 %v1623, %v1623
    %v1625 = vld [vmem:[%s1 + $0x9c] sm:$0xf]
    %v1626 = vld [vmem:[%s1 + $0xa0] sm:$0xf]
    %v1627 = vld [vmem:[%s1 + $0xa4] sm:$0xf]
    %v1628 = vld [vmem:[%s1 + $0xa8] sm:$0xf]
    %v1629 = vld [vmem:[%s1 + $0xac] sm:$0xf]
    %v1630 = vld [vmem:[%s1 + $0xb0] sm:$0xf]
    %v1631 = vld [vmem:[%s2 + $0x9] sm:$0x1]
    %v1632 = vlaneseq
    %v1633 = vshrl.u32 %v1632, 7
    %v1634 = vsub.s32 0, %v1633
    %v1635 = vrot.slane %v1631, %v1634
    %v1642 = vunpack.c.l.b16 %v1625
    %v1643 = vunpack.c.l.b16 %v1626
    %v1644 = vunpack.c.l.b16 %v1627
    %v1645 = vunpack.c.l.b16 %v1628
    %v1646 = vunpack.c.l.b16 %v1629
    %v1647 = vunpack.c.l.b16 %v1630
    %v1648 = vpack.c.b16 %v1643, %v1642
    %v1649 = vpack.c.b16 %v1645, %v1644
    %v1650 = vpack.c.b16 %v1647, %v1646
    %v1655 = vsel %vm1547, %v1624, 0
    %1657 = vmatprep.subr.bf16.mxu0 0
    %1658 = vmatpush1.bf16.msra.mxu0 0
    %1659 = vmatprep.subr.bf16.mxu0 0
    %1660 = vmatpush1.bf16.msra.mxu0 0
    %1661 = vmatprep.subr.bf16.mxu0 0
    %1662 = vmatpush1.bf16.msra.mxu0 0
    %1663 = vmatprep.subr.bf16.mxu0 0
    %1664 = vmatpush1.bf16.msra.mxu0 0
    %1665 = vmatprep.subr.bf16.mxu0 0
    %1666 = vmatpush1.bf16.msra.mxu0 0
    %1667 = vmatprep.subr.bf16.mxu0 0
    %1668 = vmatpush1.bf16.msra.mxu0 %v1650
    %1669 = vmatprep.subr.bf16.mxu0 0
    %1670 = vmatpush1.bf16.msra.mxu0 %v1649
    %1671 = vmatprep.subr.bf16.mxu0 0
    %1672 = vmatpush1.bf16.msra.mxu0 %v1648
    %1673 = vmatprep.subr.bf16.mxu0 0
    %1674 = vmatpush2.bf16.msra.mxu0 0
    %1675 = vmatprep.subr.bf16.mxu0 0
    %1676 = vmatpush2.bf16.msra.mxu0 0
    %1677 = vmatprep.subr.bf16.mxu0 0
    %1678 = vmatpush2.bf16.msra.mxu0 0
    %1679 = vmatprep.subr.bf16.mxu0 0
    %1680 = vmatpush2.bf16.msra.mxu0 0
    %1681 = vmatprep.subr.bf16.mxu0 0
    %1682 = vmatpush2.bf16.msra.mxu0 0
    %1683 = vmatprep.subr.bf16.mxu0 0
    %1684 = vmatpush2.bf16.msra.mxu0 0
    %1685 = vmatprep.subr.bf16.mxu0 0
    %1686 = vmatpush2.bf16.msra.mxu0 0
    %1687 = vmatprep.subr.bf16.mxu0 0
    %1688 = vmatpush2.bf16.msra.mxu0 0
    %1689 = vmatprep.mubr.bf16.mxu0 0
    %1690 = vmatmul.mubr.bf16.gmra.mxu0 %v1655
    %v1691 = vpop.f32.mrf.mxu0
    %v1692 = vadd.f32 %v1635, %v1691
    %v1693 = vpop.f32.mrf.mxu0
    %v1694 = vpop.f32.mrf.mxu0
    %v1695 = vpop.f32.mrf.mxu0
    %1696 = vdwg.mxu0
    %vm1697 = vcmask 123904
    %1698 = vst.msk [vmem:[#allocation2] sm:$0x3] %vm1697, %v1692
    // Predicated region
    $region14: #{adaptation_forward_packed.1} parent=1 // pred_check
      _
    $region15: #{adaptation_forward_packed.1} parent=1 // pred_check_branch
      %1700 = sbr.rel (0) target = $region17
    $region16: #{adaptation_forward_packed.1} parent=1 // pred_region
      %s1702 = ssub.s32 32, 32
      %1703 = vsyncadd [#allocation3], %s1702
      %s1705 = sshll.u32 [#allocation2], 4
      %s1706 = int_to_ptr.vmem [resolvable:$true] %s1705
      %1708 = dma.vmem_to_hbm [thread:$0]  %s1706, 32, %s3, [#allocation3]
    $region17: #{adaptation_forward_packed.1} parent=1 // pred_fallthru
      _
    // Predicated region
    $region18: #{adaptation_forward_packed.1} parent=1 // pred_check
      _
    $region19: #{adaptation_forward_packed.1} parent=1 // pred_check_branch
      %1710 = sbr.rel (0) target = $region21
    $region20: #{adaptation_forward_packed.1} parent=1 // pred_region
      %1711 = dma.done [#allocation3], 32
    $region21: #{adaptation_forward_packed.1} parent=1 // pred_fallthru
      _
    %1712 = vsyncpa [#allocation3], 1

</llo_original>
